<compile_context>
chip_gen: v7x
topology: tpu7x:2x2x1
jax: 0.10.0
libtpu: 0.0.40
codegen_flags: <defaults>
</compile_context>

<pallas_src>
import functools

import jax
import jax.numpy as jnp
from jax.experimental import pallas as pl
from jax.experimental.pallas import tpu as pltpu


def _round_up(x, m):
    return ((x + m - 1) // m) * m


def _encoder_kernel(x_hbm_ref, wih_ref, whh_ref, b_ref,
                    out_ref, h_out_ref, c_out_ref,
                    act_sc, gx_sc, dma_sem,
                    *, T, B_pad, H_pad, D_all, t_chunk, w_dtype):
    """Whole multi-layer LSTM. Grid axis 0 = layer (sequential).

    x_hbm_ref: (T*B_pad, D_all)  time-major padded input, left in HBM (pl.ANY)
    wih_ref:   (1, D_all, 4*H_pad)  this layer's W_ih^T, gates [i,f,o,g], zero-padded
    whh_ref:   (1, H_pad, 4*H_pad)  this layer's W_hh^T, gates [i,f,o,g], zero-padded
    b_ref:     (1, 1, 4*H_pad)      b_ih + b_hh (f32), gates [i,f,o,g], zero-padded
    out_ref:   (T*B_pad, H_pad)     last layer's per-timestep hidden output
    h_out_ref / c_out_ref: (1, B_pad, H_pad) this layer's final hidden / cell state
    act_sc:    (T*B_pad, D_all)     VMEM: current layer's input; overwritten with output
    gx_sc:     (t_chunk*B_pad, 4*H_pad) VMEM: input projection for one time-chunk
    """
    layer = pl.program_id(0)
    chunk_rows = t_chunk * B_pad
    n_chunks = T // t_chunk
    cast = jnp.dtype(w_dtype) != jnp.dtype(jnp.float32)

    # Layer 0: DMA the (already padded) input straight HBM -> activation scratch.
    @pl.when(layer == 0)
    def _():
        cp = pltpu.make_async_copy(x_hbm_ref, act_sc, dma_sem)
        cp.start()
        cp.wait()

    wih = wih_ref[0]      # (D_all, 4*H_pad)
    whh = whh_ref[0]      # (H_pad, 4*H_pad)
    bias = b_ref[0]       # (1, 4*H_pad)

    zero_tail = (jnp.zeros((B_pad, D_all - H_pad), jnp.float32)
                 if D_all > H_pad else None)

    def chunk_body(ci, carry):
        base = pl.multiple_of(ci * chunk_rows, 8)
        a = act_sc[pl.ds(base, chunk_rows), :]
        if cast:
            a = a.astype(w_dtype)
        # Hoisted input projection: one tall MXU matmul per time-chunk.
        gx_sc[...] = (jnp.dot(a, wih, preferred_element_type=jnp.float32) + bias)

        def step(t, hc):
            h, c = hc
            r = pl.multiple_of(t * B_pad, 8)
            hh = h.astype(w_dtype) if cast else h
            # TODO(synk): pltpu.matmul_push_rhs staging of whh (invariant RHS).
            gates = gx_sc[pl.ds(r, B_pad), :] + jnp.dot(
                hh, whh, preferred_element_type=jnp.float32)        # (B_pad, 4*H_pad)
            sig = jax.nn.sigmoid(gates[:, :3 * H_pad])              # [i | f | o]
            i_g = sig[:, 0 * H_pad:1 * H_pad]
            f_g = sig[:, 1 * H_pad:2 * H_pad]
            o_g = sig[:, 2 * H_pad:3 * H_pad]
            g_g = jnp.tanh(gates[:, 3 * H_pad:])
            c_new = f_g * c + i_g * g_g
            h_new = o_g * jnp.tanh(c_new)
            if zero_tail is None:
                store = h_new
            else:
                store = jnp.concatenate([h_new, zero_tail], axis=1)  # lane-dense store
            ar = pl.multiple_of(base + r, 8)
            act_sc[pl.ds(ar, B_pad), :] = store
            return h_new, c_new

        return jax.lax.fori_loop(0, t_chunk, step, carry,
                                 unroll=min(8, t_chunk))

    h0 = jnp.zeros((B_pad, H_pad), jnp.float32)
    c0 = jnp.zeros((B_pad, H_pad), jnp.float32)
    h_f, c_f = jax.lax.fori_loop(0, n_chunks, chunk_body, (h0, c0))

    h_out_ref[0] = h_f.astype(h_out_ref.dtype)
    c_out_ref[0] = c_f.astype(c_out_ref.dtype)

    @pl.when(layer == pl.num_programs(0) - 1)
    def _():
        if D_all == H_pad:
            out_ref[...] = act_sc[...].astype(out_ref.dtype)
        else:
            out_ref[...] = act_sc[:, 0:H_pad].astype(out_ref.dtype)


def init_encoder_params(key, input_dim, hidden_dim, num_layers):
    """Deterministic params with nn.LSTM shapes (uniform +-1/sqrt(H)), gate order [i,f,g,o]."""
    params = []
    bound = 1.0 / (hidden_dim ** 0.5)
    for layer in range(num_layers):
        d_in = input_dim if layer == 0 else hidden_dim
        key, k1, k2, k3, k4 = jax.random.split(key, 5)
        w_ih = jax.random.uniform(k1, (4 * hidden_dim, d_in), jnp.float32, -bound, bound)
        w_hh = jax.random.uniform(k2, (4 * hidden_dim, hidden_dim), jnp.float32, -bound, bound)
        b_ih = jax.random.uniform(k3, (4 * hidden_dim,), jnp.float32, -bound, bound)
        b_hh = jax.random.uniform(k4, (4 * hidden_dim,), jnp.float32, -bound, bound)
        params.append(dict(w_ih=w_ih, w_hh=w_hh, b_ih=b_ih, b_hh=b_hh))
    return params


def prepare_encoder_params(params, input_dim, hidden_dim, weight_dtype=jnp.float32):
    """ONE-TIME weight prep: transpose, permute gates [i,f,g,o] -> [i,f,o,g],
    combine biases, lane-pad H -> H_pad, sublane/row-pad to D_all, stack layers,
    optionally cast the stacked weights to bf16 (MXU input dtype); bias stays f32."""
    H = hidden_dim
    H_pad = _round_up(H, 128)
    D_all = _round_up(max(input_dim, H_pad), 128)
    order = (0, 1, 3, 2)  # PyTorch [i,f,g,o] -> kernel [i,f,o,g]

    def pad_gate_t(w, rows_out):
        wt = w.T                                   # (d_in, H)
        return jnp.pad(wt, ((0, rows_out - wt.shape[0]), (0, H_pad - H)))

    wih_l, whh_l, b_l = [], [], []
    for p in params:
        gates_ih = jnp.split(p["w_ih"], 4, axis=0)     # each (H, d_in)
        gates_hh = jnp.split(p["w_hh"], 4, axis=0)     # each (H, H)
        gates_b = jnp.split(p["b_ih"] + p["b_hh"], 4)  # each (H,)
        wih_t = jnp.concatenate([pad_gate_t(gates_ih[g], D_all) for g in order], axis=1)
        whh_t = jnp.concatenate([pad_gate_t(gates_hh[g], H_pad) for g in order], axis=1)
        b_pad = jnp.concatenate([jnp.pad(gates_b[g], (0, H_pad - H)) for g in order])
        wih_l.append(wih_t.astype(weight_dtype))
        whh_l.append(whh_t.astype(weight_dtype))
        b_l.append(b_pad.reshape(1, 4 * H_pad).astype(jnp.float32))
    return jnp.stack(wih_l), jnp.stack(whh_l), jnp.stack(b_l)


@functools.partial(jax.jit, static_argnums=(4,))
def encoder_forward(x, wih_all, whh_all, b_all, hidden_dim):
    """x: (B, T, D) batch_first. Returns (output (B,T,H), (hidden (L,B,H), cell (L,B,H)))."""
    L, D_all, G = wih_all.shape
    H_pad = G // 4
    H = hidden_dim
    B, T, D_in = x.shape
    B_pad = _round_up(B, 8)

    # time-major, pad batch rows to a sublane multiple and features to D_all
    x_tm = jnp.transpose(x, (1, 0, 2)).astype(jnp.float32)
    x_tm = jnp.pad(x_tm, ((0, 0), (0, B_pad - B), (0, D_all - D_in)))
    x_2d = x_tm.reshape(T * B_pad, D_all)

    # time-chunk for the hoisted input projection (caps gx scratch at real T)
    t_chunk = min(T, 64)
    while T % t_chunk:
        t_chunk -= 1

    kernel = functools.partial(
        _encoder_kernel, T=T, B_pad=B_pad, H_pad=H_pad, D_all=D_all,
        t_chunk=t_chunk, w_dtype=wih_all.dtype)

    # VMEM budget: scratches + double-buffered weight blocks + output blocks.
    wbytes = jnp.dtype(wih_all.dtype).itemsize
    est = (T * B_pad * D_all * 4                        # act_sc
           + t_chunk * B_pad * G * 4                    # gx_sc
           + 2 * (D_all + H_pad) * G * wbytes           # double-buffered wih/whh
           + 2 * G * 4                                  # double-buffered bias
           + 2 * (T * B_pad * H_pad + 2 * B_pad * H_pad) * 4)  # output blocks
    vmem_limit = int(min(max(2 * est, 32 << 20), 56 << 20))
    # TODO(synk): on v6e (128 MiB VMEM) prefer full-sequence gx residency with a
    # higher limit; on v7x (64 MiB) keep <= ~56 MiB and tile the 4H gate axis if
    # bf16 weights alone don't fit at H >= 1024.

    out_2d, h_all, c_all = pl.pallas_call(
        kernel,
        out_shape=(
            jax.ShapeDtypeStruct((T * B_pad, H_pad), jnp.float32),
            jax.ShapeDtypeStruct((L, B_pad, H_pad), jnp.float32),
            jax.ShapeDtypeStruct((L, B_pad, H_pad), jnp.float32),
        ),
        grid_spec=pltpu.PrefetchScalarGridSpec(
            num_scalar_prefetch=0,
            grid=(L,),
            in_specs=[
                pl.BlockSpec(memory_space=pl.ANY),                  # x stays in HBM
                pl.BlockSpec((1, D_all, G), lambda l: (l, 0, 0)),   # W_ih^T per layer
                pl.BlockSpec((1, H_pad, G), lambda l: (l, 0, 0)),   # W_hh^T per layer
                pl.BlockSpec((1, 1, G), lambda l: (l, 0, 0)),       # bias per layer
            ],
            out_specs=[
                pl.BlockSpec((T * B_pad, H_pad), lambda l: (0, 0)),
                pl.BlockSpec((1, B_pad, H_pad), lambda l: (l, 0, 0)),
                pl.BlockSpec((1, B_pad, H_pad), lambda l: (l, 0, 0)),
            ],
            scratch_shapes=[
                pltpu.VMEM((T * B_pad, D_all), jnp.float32),        # inter-layer acts
                pltpu.VMEM((t_chunk * B_pad, G), jnp.float32),      # gx for one chunk
                pltpu.SemaphoreType.DMA(()),                        # layer-0 input DMA
            ],
        ),
        compiler_params=pltpu.CompilerParams(
            dimension_semantics=("arbitrary",),                     # layers sequential
            vmem_limit_bytes=vmem_limit),
    )(x_2d, wih_all, whh_all, b_all)

    out = out_2d.reshape(T, B_pad, H_pad)[:, :B, :H]
    output = jnp.transpose(out, (1, 0, 2))                          # (B, T, H)
    return output, (h_all[:, :B, :H], c_all[:, :B, :H])


def _reference_forward(x, params):
    """Pure-JAX LSTM reference (PyTorch semantics, original [i,f,g,o] gate order)."""
    B, T, _ = x.shape
    H = params[0]["w_hh"].shape[1]
    x_tm = jnp.transpose(x, (1, 0, 2))
    hs, cs = [], []
    for p in params:
        w_ih_t = p["w_ih"].T
        w_hh_t = p["w_hh"].T
        bias = p["b_ih"] + p["b_hh"]

        def step(carry, x_t):
            h, c = carry
            g = x_t @ w_ih_t + h @ w_hh_t + bias
            i = jax.nn.sigmoid(g[:, 0 * H:1 * H])
            f = jax.nn.sigmoid(g[:, 1 * H:2 * H])
            gg = jnp.tanh(g[:, 2 * H:3 * H])
            o = jax.nn.sigmoid(g[:, 3 * H:4 * H])
            c = f * c + i * gg
            h = o * jnp.tanh(c)
            return (h, c), h

        (h_f, c_f), out = jax.lax.scan(
            step, (jnp.zeros((B, H)), jnp.zeros((B, H))), x_tm)
        x_tm = out
        hs.append(h_f)
        cs.append(c_f)
    return jnp.transpose(x_tm, (1, 0, 2)), (jnp.stack(hs), jnp.stack(cs))


if __name__ == "__main__":
    batch, seq, input_dim, hidden_dim, num_layers = 2, 8, 4, 32, 2

    key = jax.random.PRNGKey(0)
    key, xk = jax.random.split(key)
    x = jax.random.normal(xk, (batch, seq, input_dim), dtype=jnp.float32)
    params = init_encoder_params(key, input_dim, hidden_dim, num_layers)

    ref_out, (ref_h, ref_c) = _reference_forward(x, params)

    # --- f32 weights: exact-path numerics check ---
    w_f32 = prepare_encoder_params(params, input_dim, hidden_dim, jnp.float32)
    output, (hidden, cell) = encoder_forward(x, *w_f32, hidden_dim)
    jax.block_until_ready((output, hidden, cell))
    assert output.shape == (batch, seq, hidden_dim)
    assert hidden.shape == (num_layers, batch, hidden_dim)
    assert cell.shape == (num_layers, batch, hidden_dim)
    assert jnp.allclose(output, ref_out, atol=1e-4), "output mismatch (f32)"
    assert jnp.allclose(hidden, ref_h, atol=1e-4), "hidden mismatch (f32)"
    assert jnp.allclose(cell, ref_c, atol=1e-4), "cell mismatch (f32)"

    # --- bf16 weights (production path: native MXU dtype, half the weight DMA/VMEM) ---
    w_bf16 = prepare_encoder_params(params, input_dim, hidden_dim, jnp.bfloat16)
    out_bf, (h_bf, c_bf) = encoder_forward(x, *w_bf16, hidden_dim)
    jax.block_until_ready((out_bf, h_bf, c_bf))
    assert jnp.allclose(out_bf, ref_out, atol=5e-2), "output mismatch (bf16 weights)"
    assert jnp.allclose(h_bf, ref_h, atol=5e-2), "hidden mismatch (bf16 weights)"
    assert jnp.allclose(c_bf, ref_c, atol=5e-2), "cell mismatch (bf16 weights)"

    print("KERNEL_OK")
</pallas_src>

<mosaic_0001>
module attributes {stable_mosaic.version = 11 : i64} {
  func.func @_encoder_kernel(%arg0: i32, %arg1: memref<64x128xf32, #tpu.memory_space<any>>, %arg2: memref<1x128x512xf32, #tpu.memory_space<vmem>>, %arg3: memref<1x128x512xf32, #tpu.memory_space<vmem>>, %arg4: memref<1x1x512xf32, #tpu.memory_space<vmem>>, %arg5: memref<64x128xf32, #tpu.memory_space<vmem>>, %arg6: memref<1x8x128xf32, #tpu.memory_space<vmem>>, %arg7: memref<1x8x128xf32, #tpu.memory_space<vmem>>, %arg8: memref<64x128xf32, #tpu.memory_space<vmem>>, %arg9: memref<64x512xf32, #tpu.memory_space<vmem>>, %arg10: memref<!tpu.dma_semaphore, #tpu.memory_space<semaphore_mem>>) attributes {dimension_semantics = [#tpu.dimension_semantics<arbitrary>], iteration_bounds = array<i64: 2>, scalar_prefetch = 0 : i64, scratch_operands = 3 : i64, tpu.core_type = #tpu.core_type<tc>, window_params = [{}, {transform_indices = @transform_1, window_bounds = array<i64: 1, 128, 512>}, {transform_indices = @transform_2, window_bounds = array<i64: 1, 128, 512>}, {transform_indices = @transform_3, window_bounds = array<i64: 1, 1, 512>}, {pipeline_mode = #tpu.pipeline_mode<synchronous>, transform_indices = @transform_4, window_bounds = array<i64: 64, 128>}, {transform_indices = @transform_5, window_bounds = array<i64: 1, 8, 128>}, {transform_indices = @transform_6, window_bounds = array<i64: 1, 8, 128>}]} {
    %c0_i32 = arith.constant 0 : i32
    %0 = arith.cmpi eq, %arg0, %c0_i32 : i32
    %1 = arith.extui %0 : i1 to i32
    %c0_i32_0 = arith.constant 0 : i32
    %2 = arith.cmpi ne, %1, %c0_i32_0 : i32
    scf.if %2 {
      tpu.enqueue_dma source(%arg1 : memref<64x128xf32, #tpu.memory_space<any>>) target(%arg8 : memref<64x128xf32, #tpu.memory_space<vmem>>) target_semaphore(%arg10 : memref<!tpu.dma_semaphore, #tpu.memory_space<semaphore_mem>>)
      tpu.wait_dma2 semaphore(%arg10 : memref<!tpu.dma_semaphore, #tpu.memory_space<semaphore_mem>>) src(%arg1 : memref<64x128xf32, #tpu.memory_space<any>>) dst(%arg8 : memref<64x128xf32, #tpu.memory_space<vmem>>)
    } else {
    }
    %c0 = arith.constant 0 : index
    %c0_1 = arith.constant 0 : index
    %c0_2 = arith.constant 0 : index
    %3 = vector.load %arg2[%c0, %c0_1, %c0_2] : memref<1x128x512xf32, #tpu.memory_space<vmem>>, vector<1x128x512xf32>
    %4 = vector.shape_cast %3 : vector<1x128x512xf32> to vector<128x512xf32>
    %c0_3 = arith.constant 0 : index
    %c0_4 = arith.constant 0 : index
    %c0_5 = arith.constant 0 : index
    %5 = vector.load %arg3[%c0_3, %c0_4, %c0_5] : memref<1x128x512xf32, #tpu.memory_space<vmem>>, vector<1x128x512xf32>
    %6 = vector.shape_cast %5 : vector<1x128x512xf32> to vector<128x512xf32>
    %c0_6 = arith.constant 0 : index
    %c0_7 = arith.constant 0 : index
    %c0_8 = arith.constant 0 : index
    %7 = vector.load %arg4[%c0_6, %c0_7, %c0_8] : memref<1x1x512xf32, #tpu.memory_space<vmem>>, vector<1x1x512xf32>
    %8 = vector.shape_cast %7 : vector<1x1x512xf32> to vector<1x512xf32>
    %cst = arith.constant 0.000000e+00 : f32
    %9 = vector.broadcast %cst : f32 to vector<8x128xf32>
    %cst_9 = arith.constant 0.000000e+00 : f32
    %10 = vector.broadcast %cst_9 : f32 to vector<8x128xf32>
    %c0_i32_10 = arith.constant 0 : i32
    %c64_i32 = arith.constant 64 : i32
    %11 = arith.muli %c0_i32_10, %c64_i32 : i32
    %12 = tpu.assume_multiple %11, 8 : i32
    %13 = arith.index_cast %12 : i32 to index
    %c0_11 = arith.constant 0 : index
    %14 = vector.load %arg8[%13, %c0_11] : memref<64x128xf32, #tpu.memory_space<vmem>>, vector<64x128xf32>
    %cst_12 = arith.constant dense<0.000000e+00> : vector<64x512xf32>
    %15 = tpu.matmul %14, %4, %cst_12 {dimension_numbers = #tpu.dot_dimension_numbers<[1], [0], [0], [1], [0, 0, 1, 1], [], []>} : vector<64x128xf32>, vector<128x512xf32>, vector<64x512xf32> -> vector<64x512xf32>
    %16 = vector.broadcast %8 : vector<1x512xf32> to vector<64x512xf32>
    %17 = arith.addf %15, %16 : vector<64x512xf32>
    %c0_13 = arith.constant 0 : index
    %c0_14 = arith.constant 0 : index
    %18 = vector.load %arg9[%c0_13, %c0_14] : memref<64x512xf32, #tpu.memory_space<vmem>>, vector<64x512xf32>
    tpu.vector_store %arg9[%c0_13, %c0_14], %17 {strides = array<i32>} : memref<64x512xf32, #tpu.memory_space<vmem>>, vector<64x512xf32>,
    %c0_i32_15 = arith.constant 0 : i32
    %c8_i32 = arith.constant 8 : i32
    %19 = arith.muli %c0_i32_15, %c8_i32 : i32
    %20 = tpu.assume_multiple %19, 8 : i32
    %21 = arith.index_cast %20 : i32 to index
    %c0_16 = arith.constant 0 : index
    %22 = vector.load %arg9[%21, %c0_16] : memref<64x512xf32, #tpu.memory_space<vmem>>, vector<8x512xf32>
    %cst_17 = arith.constant dense<0.000000e+00> : vector<8x512xf32>
    %23 = tpu.matmul %9, %6, %cst_17 {dimension_numbers = #tpu.dot_dimension_numbers<[1], [0], [0], [1], [0, 0, 1, 1], [], []>} : vector<8x128xf32>, vector<128x512xf32>, vector<8x512xf32> -> vector<8x512xf32>
    %24 = arith.addf %22, %23 : vector<8x512xf32>
    %25 = vector.extract_strided_slice %24 {offsets = [0, 0], sizes = [8, 384], strides = [1, 1]} : vector<8x512xf32> to vector<8x384xf32>
    %26 = arith.negf %25 : vector<8x384xf32>
    %27 = math.exp %26 : vector<8x384xf32>
    %cst_18 = arith.constant 1.000000e+00 : f32
    %28 = vector.broadcast %cst_18 : f32 to vector<8x384xf32>
    %29 = arith.addf %28, %27 : vector<8x384xf32>
    %30 = arith.divf %28, %29 : vector<8x384xf32>
    %31 = vector.extract_strided_slice %30 {offsets = [0, 0], sizes = [8, 128], strides = [1, 1]} : vector<8x384xf32> to vector<8x128xf32>
    %32 = vector.extract_strided_slice %30 {offsets = [0, 128], sizes = [8, 128], strides = [1, 1]} : vector<8x384xf32> to vector<8x128xf32>
    %33 = vector.extract_strided_slice %30 {offsets = [0, 256], sizes = [8, 128], strides = [1, 1]} : vector<8x384xf32> to vector<8x128xf32>
    %34 = vector.extract_strided_slice %24 {offsets = [0, 384], sizes = [8, 128], strides = [1, 1]} : vector<8x512xf32> to vector<8x128xf32>
    %35 = math.tanh %34 : vector<8x128xf32>
    %36 = arith.mulf %32, %10 : vector<8x128xf32>
    %37 = arith.mulf %31, %35 : vector<8x128xf32>
    %38 = arith.addf %36, %37 : vector<8x128xf32>
    %39 = math.tanh %38 : vector<8x128xf32>
    %40 = arith.mulf %33, %39 : vector<8x128xf32>
    %41 = arith.addi %12, %20 : i32
    %42 = tpu.assume_multiple %41, 8 : i32
    %43 = arith.index_cast %42 : i32 to index
    %c0_19 = arith.constant 0 : index
    %44 = vector.load %arg8[%43, %c0_19] : memref<64x128xf32, #tpu.memory_space<vmem>>, vector<8x128xf32>
    tpu.vector_store %arg8[%43, %c0_19], %40 {strides = array<i32>} : memref<64x128xf32, #tpu.memory_space<vmem>>, vector<8x128xf32>,
    %c1_i32 = arith.constant 1 : i32
    %c8_i32_20 = arith.constant 8 : i32
    %45 = arith.muli %c1_i32, %c8_i32_20 : i32
    %46 = tpu.assume_multiple %45, 8 : i32
    %47 = arith.index_cast %46 : i32 to index
    %c0_21 = arith.constant 0 : index
    %48 = vector.load %arg9[%47, %c0_21] : memref<64x512xf32, #tpu.memory_space<vmem>>, vector<8x512xf32>
    %cst_22 = arith.constant dense<0.000000e+00> : vector<8x512xf32>
    %49 = tpu.matmul %40, %6, %cst_22 {dimension_numbers = #tpu.dot_dimension_numbers<[1], [0], [0], [1], [0, 0, 1, 1], [], []>} : vector<8x128xf32>, vector<128x512xf32>, vector<8x512xf32> -> vector<8x512xf32>
    %50 = arith.addf %48, %49 : vector<8x512xf32>
    %51 = vector.extract_strided_slice %50 {offsets = [0, 0], sizes = [8, 384], strides = [1, 1]} : vector<8x512xf32> to vector<8x384xf32>
    %52 = arith.negf %51 : vector<8x384xf32>
    %53 = math.exp %52 : vector<8x384xf32>
    %cst_23 = arith.constant 1.000000e+00 : f32
    %54 = vector.broadcast %cst_23 : f32 to vector<8x384xf32>
    %55 = arith.addf %54, %53 : vector<8x384xf32>
    %56 = arith.divf %54, %55 : vector<8x384xf32>
    %57 = vector.extract_strided_slice %56 {offsets = [0, 0], sizes = [8, 128], strides = [1, 1]} : vector<8x384xf32> to vector<8x128xf32>
    %58 = vector.extract_strided_slice %56 {offsets = [0, 128], sizes = [8, 128], strides = [1, 1]} : vector<8x384xf32> to vector<8x128xf32>
    %59 = vector.extract_strided_slice %56 {offsets = [0, 256], sizes = [8, 128], strides = [1, 1]} : vector<8x384xf32> to vector<8x128xf32>
    %60 = vector.extract_strided_slice %50 {offsets = [0, 384], sizes = [8, 128], strides = [1, 1]} : vector<8x512xf32> to vector<8x128xf32>
    %61 = math.tanh %60 : vector<8x128xf32>
    %62 = arith.mulf %58, %38 : vector<8x128xf32>
    %63 = arith.mulf %57, %61 : vector<8x128xf32>
    %64 = arith.addf %62, %63 : vector<8x128xf32>
    %65 = math.tanh %64 : vector<8x128xf32>
    %66 = arith.mulf %59, %65 : vector<8x128xf32>
    %67 = arith.addi %12, %46 : i32
    %68 = tpu.assume_multiple %67, 8 : i32
    %69 = arith.index_cast %68 : i32 to index
    %c0_24 = arith.constant 0 : index
    %70 = vector.load %arg8[%69, %c0_24] : memref<64x128xf32, #tpu.memory_space<vmem>>, vector<8x128xf32>
    tpu.vector_store %arg8[%69, %c0_24], %66 {strides = array<i32>} : memref<64x128xf32, #tpu.memory_space<vmem>>, vector<8x128xf32>,
    %c2_i32 = arith.constant 2 : i32
    %c8_i32_25 = arith.constant 8 : i32
    %71 = arith.muli %c2_i32, %c8_i32_25 : i32
    %72 = tpu.assume_multiple %71, 8 : i32
    %73 = arith.index_cast %72 : i32 to index
    %c0_26 = arith.constant 0 : index
    %74 = vector.load %arg9[%73, %c0_26] : memref<64x512xf32, #tpu.memory_space<vmem>>, vector<8x512xf32>
    %cst_27 = arith.constant dense<0.000000e+00> : vector<8x512xf32>
    %75 = tpu.matmul %66, %6, %cst_27 {dimension_numbers = #tpu.dot_dimension_numbers<[1], [0], [0], [1], [0, 0, 1, 1], [], []>} : vector<8x128xf32>, vector<128x512xf32>, vector<8x512xf32> -> vector<8x512xf32>
    %76 = arith.addf %74, %75 : vector<8x512xf32>
    %77 = vector.extract_strided_slice %76 {offsets = [0, 0], sizes = [8, 384], strides = [1, 1]} : vector<8x512xf32> to vector<8x384xf32>
    %78 = arith.negf %77 : vector<8x384xf32>
    %79 = math.exp %78 : vector<8x384xf32>
    %cst_28 = arith.constant 1.000000e+00 : f32
    %80 = vector.broadcast %cst_28 : f32 to vector<8x384xf32>
    %81 = arith.addf %80, %79 : vector<8x384xf32>
    %82 = arith.divf %80, %81 : vector<8x384xf32>
    %83 = vector.extract_strided_slice %82 {offsets = [0, 0], sizes = [8, 128], strides = [1, 1]} : vector<8x384xf32> to vector<8x128xf32>
    %84 = vector.extract_strided_slice %82 {offsets = [0, 128], sizes = [8, 128], strides = [1, 1]} : vector<8x384xf32> to vector<8x128xf32>
    %85 = vector.extract_strided_slice %82 {offsets = [0, 256], sizes = [8, 128], strides = [1, 1]} : vector<8x384xf32> to vector<8x128xf32>
    %86 = vector.extract_strided_slice %76 {offsets = [0, 384], sizes = [8, 128], strides = [1, 1]} : vector<8x512xf32> to vector<8x128xf32>
    %87 = math.tanh %86 : vector<8x128xf32>
    %88 = arith.mulf %84, %64 : vector<8x128xf32>
    %89 = arith.mulf %83, %87 : vector<8x128xf32>
    %90 = arith.addf %88, %89 : vector<8x128xf32>
    %91 = math.tanh %90 : vector<8x128xf32>
    %92 = arith.mulf %85, %91 : vector<8x128xf32>
    %93 = arith.addi %12, %72 : i32
    %94 = tpu.assume_multiple %93, 8 : i32
    %95 = arith.index_cast %94 : i32 to index
    %c0_29 = arith.constant 0 : index
    %96 = vector.load %arg8[%95, %c0_29] : memref<64x128xf32, #tpu.memory_space<vmem>>, vector<8x128xf32>
    tpu.vector_store %arg8[%95, %c0_29], %92 {strides = array<i32>} : memref<64x128xf32, #tpu.memory_space<vmem>>, vector<8x128xf32>,
    %c3_i32 = arith.constant 3 : i32
    %c8_i32_30 = arith.constant 8 : i32
    %97 = arith.muli %c3_i32, %c8_i32_30 : i32
    %98 = tpu.assume_multiple %97, 8 : i32
    %99 = arith.index_cast %98 : i32 to index
    %c0_31 = arith.constant 0 : index
    %100 = vector.load %arg9[%99, %c0_31] : memref<64x512xf32, #tpu.memory_space<vmem>>, vector<8x512xf32>
    %cst_32 = arith.constant dense<0.000000e+00> : vector<8x512xf32>
    %101 = tpu.matmul %92, %6, %cst_32 {dimension_numbers = #tpu.dot_dimension_numbers<[1], [0], [0], [1], [0, 0, 1, 1], [], []>} : vector<8x128xf32>, vector<128x512xf32>, vector<8x512xf32> -> vector<8x512xf32>
    %102 = arith.addf %100, %101 : vector<8x512xf32>
    %103 = vector.extract_strided_slice %102 {offsets = [0, 0], sizes = [8, 384], strides = [1, 1]} : vector<8x512xf32> to vector<8x384xf32>
    %104 = arith.negf %103 : vector<8x384xf32>
    %105 = math.exp %104 : vector<8x384xf32>
    %cst_33 = arith.constant 1.000000e+00 : f32
    %106 = vector.broadcast %cst_33 : f32 to vector<8x384xf32>
    %107 = arith.addf %106, %105 : vector<8x384xf32>
    %108 = arith.divf %106, %107 : vector<8x384xf32>
    %109 = vector.extract_strided_slice %108 {offsets = [0, 0], sizes = [8, 128], strides = [1, 1]} : vector<8x384xf32> to vector<8x128xf32>
    %110 = vector.extract_strided_slice %108 {offsets = [0, 128], sizes = [8, 128], strides = [1, 1]} : vector<8x384xf32> to vector<8x128xf32>
    %111 = vector.extract_strided_slice %108 {offsets = [0, 256], sizes = [8, 128], strides = [1, 1]} : vector<8x384xf32> to vector<8x128xf32>
    %112 = vector.extract_strided_slice %102 {offsets = [0, 384], sizes = [8, 128], strides = [1, 1]} : vector<8x512xf32> to vector<8x128xf32>
    %113 = math.tanh %112 : vector<8x128xf32>
    %114 = arith.mulf %110, %90 : vector<8x128xf32>
    %115 = arith.mulf %109, %113 : vector<8x128xf32>
    %116 = arith.addf %114, %115 : vector<8x128xf32>
    %117 = math.tanh %116 : vector<8x128xf32>
    %118 = arith.mulf %111, %117 : vector<8x128xf32>
    %119 = arith.addi %12, %98 : i32
    %120 = tpu.assume_multiple %119, 8 : i32
    %121 = arith.index_cast %120 : i32 to index
    %c0_34 = arith.constant 0 : index
    %122 = vector.load %arg8[%121, %c0_34] : memref<64x128xf32, #tpu.memory_space<vmem>>, vector<8x128xf32>
    tpu.vector_store %arg8[%121, %c0_34], %118 {strides = array<i32>} : memref<64x128xf32, #tpu.memory_space<vmem>>, vector<8x128xf32>,
    %c4_i32 = arith.constant 4 : i32
    %c8_i32_35 = arith.constant 8 : i32
    %123 = arith.muli %c4_i32, %c8_i32_35 : i32
    %124 = tpu.assume_multiple %123, 8 : i32
    %125 = arith.index_cast %124 : i32 to index
    %c0_36 = arith.constant 0 : index
    %126 = vector.load %arg9[%125, %c0_36] : memref<64x512xf32, #tpu.memory_space<vmem>>, vector<8x512xf32>
    %cst_37 = arith.constant dense<0.000000e+00> : vector<8x512xf32>
    %127 = tpu.matmul %118, %6, %cst_37 {dimension_numbers = #tpu.dot_dimension_numbers<[1], [0], [0], [1], [0, 0, 1, 1], [], []>} : vector<8x128xf32>, vector<128x512xf32>, vector<8x512xf32> -> vector<8x512xf32>
    %128 = arith.addf %126, %127 : vector<8x512xf32>
    %129 = vector.extract_strided_slice %128 {offsets = [0, 0], sizes = [8, 384], strides = [1, 1]} : vector<8x512xf32> to vector<8x384xf32>
    %130 = arith.negf %129 : vector<8x384xf32>
    %131 = math.exp %130 : vector<8x384xf32>
    %cst_38 = arith.constant 1.000000e+00 : f32
    %132 = vector.broadcast %cst_38 : f32 to vector<8x384xf32>
    %133 = arith.addf %132, %131 : vector<8x384xf32>
    %134 = arith.divf %132, %133 : vector<8x384xf32>
    %135 = vector.extract_strided_slice %134 {offsets = [0, 0], sizes = [8, 128], strides = [1, 1]} : vector<8x384xf32> to vector<8x128xf32>
    %136 = vector.extract_strided_slice %134 {offsets = [0, 128], sizes = [8, 128], strides = [1, 1]} : vector<8x384xf32> to vector<8x128xf32>
    %137 = vector.extract_strided_slice %134 {offsets = [0, 256], sizes = [8, 128], strides = [1, 1]} : vector<8x384xf32> to vector<8x128xf32>
    %138 = vector.extract_strided_slice %128 {offsets = [0, 384], sizes = [8, 128], strides = [1, 1]} : vector<8x512xf32> to vector<8x128xf32>
    %139 = math.tanh %138 : vector<8x128xf32>
    %140 = arith.mulf %136, %116 : vector<8x128xf32>
    %141 = arith.mulf %135, %139 : vector<8x128xf32>
    %142 = arith.addf %140, %141 : vector<8x128xf32>
    %143 = math.tanh %142 : vector<8x128xf32>
    %144 = arith.mulf %137, %143 : vector<8x128xf32>
    %145 = arith.addi %12, %124 : i32
    %146 = tpu.assume_multiple %145, 8 : i32
    %147 = arith.index_cast %146 : i32 to index
    %c0_39 = arith.constant 0 : index
    %148 = vector.load %arg8[%147, %c0_39] : memref<64x128xf32, #tpu.memory_space<vmem>>, vector<8x128xf32>
    tpu.vector_store %arg8[%147, %c0_39], %144 {strides = array<i32>} : memref<64x128xf32, #tpu.memory_space<vmem>>, vector<8x128xf32>,
    %c5_i32 = arith.constant 5 : i32
    %c8_i32_40 = arith.constant 8 : i32
    %149 = arith.muli %c5_i32, %c8_i32_40 : i32
    %150 = tpu.assume_multiple %149, 8 : i32
    %151 = arith.index_cast %150 : i32 to index
    %c0_41 = arith.constant 0 : index
    %152 = vector.load %arg9[%151, %c0_41] : memref<64x512xf32, #tpu.memory_space<vmem>>, vector<8x512xf32>
    %cst_42 = arith.constant dense<0.000000e+00> : vector<8x512xf32>
    %153 = tpu.matmul %144, %6, %cst_42 {dimension_numbers = #tpu.dot_dimension_numbers<[1], [0], [0], [1], [0, 0, 1, 1], [], []>} : vector<8x128xf32>, vector<128x512xf32>, vector<8x512xf32> -> vector<8x512xf32>
    %154 = arith.addf %152, %153 : vector<8x512xf32>
    %155 = vector.extract_strided_slice %154 {offsets = [0, 0], sizes = [8, 384], strides = [1, 1]} : vector<8x512xf32> to vector<8x384xf32>
    %156 = arith.negf %155 : vector<8x384xf32>
    %157 = math.exp %156 : vector<8x384xf32>
    %cst_43 = arith.constant 1.000000e+00 : f32
    %158 = vector.broadcast %cst_43 : f32 to vector<8x384xf32>
    %159 = arith.addf %158, %157 : vector<8x384xf32>
    %160 = arith.divf %158, %159 : vector<8x384xf32>
    %161 = vector.extract_strided_slice %160 {offsets = [0, 0], sizes = [8, 128], strides = [1, 1]} : vector<8x384xf32> to vector<8x128xf32>
    %162 = vector.extract_strided_slice %160 {offsets = [0, 128], sizes = [8, 128], strides = [1, 1]} : vector<8x384xf32> to vector<8x128xf32>
    %163 = vector.extract_strided_slice %160 {offsets = [0, 256], sizes = [8, 128], strides = [1, 1]} : vector<8x384xf32> to vector<8x128xf32>
    %164 = vector.extract_strided_slice %154 {offsets = [0, 384], sizes = [8, 128], strides = [1, 1]} : vector<8x512xf32> to vector<8x128xf32>
    %165 = math.tanh %164 : vector<8x128xf32>
    %166 = arith.mulf %162, %142 : vector<8x128xf32>
    %167 = arith.mulf %161, %165 : vector<8x128xf32>
    %168 = arith.addf %166, %167 : vector<8x128xf32>
    %169 = math.tanh %168 : vector<8x128xf32>
    %170 = arith.mulf %163, %169 : vector<8x128xf32>
    %171 = arith.addi %12, %150 : i32
    %172 = tpu.assume_multiple %171, 8 : i32
    %173 = arith.index_cast %172 : i32 to index
    %c0_44 = arith.constant 0 : index
    %174 = vector.load %arg8[%173, %c0_44] : memref<64x128xf32, #tpu.memory_space<vmem>>, vector<8x128xf32>
    tpu.vector_store %arg8[%173, %c0_44], %170 {strides = array<i32>} : memref<64x128xf32, #tpu.memory_space<vmem>>, vector<8x128xf32>,
    %c6_i32 = arith.constant 6 : i32
    %c8_i32_45 = arith.constant 8 : i32
    %175 = arith.muli %c6_i32, %c8_i32_45 : i32
    %176 = tpu.assume_multiple %175, 8 : i32
    %177 = arith.index_cast %176 : i32 to index
    %c0_46 = arith.constant 0 : index
    %178 = vector.load %arg9[%177, %c0_46] : memref<64x512xf32, #tpu.memory_space<vmem>>, vector<8x512xf32>
    %cst_47 = arith.constant dense<0.000000e+00> : vector<8x512xf32>
    %179 = tpu.matmul %170, %6, %cst_47 {dimension_numbers = #tpu.dot_dimension_numbers<[1], [0], [0], [1], [0, 0, 1, 1], [], []>} : vector<8x128xf32>, vector<128x512xf32>, vector<8x512xf32> -> vector<8x512xf32>
    %180 = arith.addf %178, %179 : vector<8x512xf32>
    %181 = vector.extract_strided_slice %180 {offsets = [0, 0], sizes = [8, 384], strides = [1, 1]} : vector<8x512xf32> to vector<8x384xf32>
    %182 = arith.negf %181 : vector<8x384xf32>
    %183 = math.exp %182 : vector<8x384xf32>
    %cst_48 = arith.constant 1.000000e+00 : f32
    %184 = vector.broadcast %cst_48 : f32 to vector<8x384xf32>
    %185 = arith.addf %184, %183 : vector<8x384xf32>
    %186 = arith.divf %184, %185 : vector<8x384xf32>
    %187 = vector.extract_strided_slice %186 {offsets = [0, 0], sizes = [8, 128], strides = [1, 1]} : vector<8x384xf32> to vector<8x128xf32>
    %188 = vector.extract_strided_slice %186 {offsets = [0, 128], sizes = [8, 128], strides = [1, 1]} : vector<8x384xf32> to vector<8x128xf32>
    %189 = vector.extract_strided_slice %186 {offsets = [0, 256], sizes = [8, 128], strides = [1, 1]} : vector<8x384xf32> to vector<8x128xf32>
    %190 = vector.extract_strided_slice %180 {offsets = [0, 384], sizes = [8, 128], strides = [1, 1]} : vector<8x512xf32> to vector<8x128xf32>
    %191 = math.tanh %190 : vector<8x128xf32>
    %192 = arith.mulf %188, %168 : vector<8x128xf32>
    %193 = arith.mulf %187, %191 : vector<8x128xf32>
    %194 = arith.addf %192, %193 : vector<8x128xf32>
    %195 = math.tanh %194 : vector<8x128xf32>
    %196 = arith.mulf %189, %195 : vector<8x128xf32>
    %197 = arith.addi %12, %176 : i32
    %198 = tpu.assume_multiple %197, 8 : i32
    %199 = arith.index_cast %198 : i32 to index
    %c0_49 = arith.constant 0 : index
    %200 = vector.load %arg8[%199, %c0_49] : memref<64x128xf32, #tpu.memory_space<vmem>>, vector<8x128xf32>
    tpu.vector_store %arg8[%199, %c0_49], %196 {strides = array<i32>} : memref<64x128xf32, #tpu.memory_space<vmem>>, vector<8x128xf32>,
    %c7_i32 = arith.constant 7 : i32
    %c8_i32_50 = arith.constant 8 : i32
    %201 = arith.muli %c7_i32, %c8_i32_50 : i32
    %202 = tpu.assume_multiple %201, 8 : i32
    %203 = arith.index_cast %202 : i32 to index
    %c0_51 = arith.constant 0 : index
    %204 = vector.load %arg9[%203, %c0_51] : memref<64x512xf32, #tpu.memory_space<vmem>>, vector<8x512xf32>
    %cst_52 = arith.constant dense<0.000000e+00> : vector<8x512xf32>
    %205 = tpu.matmul %196, %6, %cst_52 {dimension_numbers = #tpu.dot_dimension_numbers<[1], [0], [0], [1], [0, 0, 1, 1], [], []>} : vector<8x128xf32>, vector<128x512xf32>, vector<8x512xf32> -> vector<8x512xf32>
    %206 = arith.addf %204, %205 : vector<8x512xf32>
    %207 = vector.extract_strided_slice %206 {offsets = [0, 0], sizes = [8, 384], strides = [1, 1]} : vector<8x512xf32> to vector<8x384xf32>
    %208 = arith.negf %207 : vector<8x384xf32>
    %209 = math.exp %208 : vector<8x384xf32>
    %cst_53 = arith.constant 1.000000e+00 : f32
    %210 = vector.broadcast %cst_53 : f32 to vector<8x384xf32>
    %211 = arith.addf %210, %209 : vector<8x384xf32>
    %212 = arith.divf %210, %211 : vector<8x384xf32>
    %213 = vector.extract_strided_slice %212 {offsets = [0, 0], sizes = [8, 128], strides = [1, 1]} : vector<8x384xf32> to vector<8x128xf32>
    %214 = vector.extract_strided_slice %212 {offsets = [0, 128], sizes = [8, 128], strides = [1, 1]} : vector<8x384xf32> to vector<8x128xf32>
    %215 = vector.extract_strided_slice %212 {offsets = [0, 256], sizes = [8, 128], strides = [1, 1]} : vector<8x384xf32> to vector<8x128xf32>
    %216 = vector.extract_strided_slice %206 {offsets = [0, 384], sizes = [8, 128], strides = [1, 1]} : vector<8x512xf32> to vector<8x128xf32>
    %217 = math.tanh %216 : vector<8x128xf32>
    %218 = arith.mulf %214, %194 : vector<8x128xf32>
    %219 = arith.mulf %213, %217 : vector<8x128xf32>
    %220 = arith.addf %218, %219 : vector<8x128xf32>
    %221 = math.tanh %220 : vector<8x128xf32>
    %222 = arith.mulf %215, %221 : vector<8x128xf32>
    %223 = arith.addi %12, %202 : i32
    %224 = tpu.assume_multiple %223, 8 : i32
    %225 = arith.index_cast %224 : i32 to index
    %c0_54 = arith.constant 0 : index
    %226 = vector.load %arg8[%225, %c0_54] : memref<64x128xf32, #tpu.memory_space<vmem>>, vector<8x128xf32>
    tpu.vector_store %arg8[%225, %c0_54], %222 {strides = array<i32>} : memref<64x128xf32, #tpu.memory_space<vmem>>, vector<8x128xf32>,
    %c8_i32_55 = arith.constant 8 : i32
    %c1_i32_56 = arith.constant 1 : i32
    %c0_57 = arith.constant 0 : index
    %c0_58 = arith.constant 0 : index
    %c0_59 = arith.constant 0 : index
    %227 = vector.load %arg6[%c0_57, %c0_58, %c0_59] : memref<1x8x128xf32, #tpu.memory_space<vmem>>, vector<1x8x128xf32>
    %228 = vector.shape_cast %227 : vector<1x8x128xf32> to vector<8x128xf32>
    %229 = vector.shape_cast %222 : vector<8x128xf32> to vector<1x8x128xf32>
    tpu.vector_store %arg6[%c0_57, %c0_58, %c0_59], %229 {strides = array<i32>} : memref<1x8x128xf32, #tpu.memory_space<vmem>>, vector<1x8x128xf32>,
    %c0_60 = arith.constant 0 : index
    %c0_61 = arith.constant 0 : index
    %c0_62 = arith.constant 0 : index
    %230 = vector.load %arg7[%c0_60, %c0_61, %c0_62] : memref<1x8x128xf32, #tpu.memory_space<vmem>>, vector<1x8x128xf32>
    %231 = vector.shape_cast %230 : vector<1x8x128xf32> to vector<8x128xf32>
    %232 = vector.shape_cast %220 : vector<8x128xf32> to vector<1x8x128xf32>
    tpu.vector_store %arg7[%c0_60, %c0_61, %c0_62], %232 {strides = array<i32>} : memref<1x8x128xf32, #tpu.memory_space<vmem>>, vector<1x8x128xf32>,
    %c1_i32_63 = arith.constant 1 : i32
    %233 = arith.cmpi eq, %arg0, %c1_i32_63 : i32
    %234 = arith.extui %233 : i1 to i32
    %c0_i32_64 = arith.constant 0 : i32
    %235 = arith.cmpi ne, %234, %c0_i32_64 : i32
    scf.if %235 {
      %c0_65 = arith.constant 0 : index
      %c0_66 = arith.constant 0 : index
      %236 = vector.load %arg8[%c0_65, %c0_66] : memref<64x128xf32, #tpu.memory_space<vmem>>, vector<64x128xf32>
      %c0_67 = arith.constant 0 : index
      %c0_68 = arith.constant 0 : index
      %237 = vector.load %arg5[%c0_67, %c0_68] : memref<64x128xf32, #tpu.memory_space<vmem>>, vector<64x128xf32>
      tpu.vector_store %arg5[%c0_67, %c0_68], %236 {strides = array<i32>} : memref<64x128xf32, #tpu.memory_space<vmem>>, vector<64x128xf32>,
    } else {
    }
    return
  }
  func.func @transform_1(%arg0: i32) -> (i32, i32, i32) {
    %c0_i32 = arith.constant 0 : i32
    %c0_i32_0 = arith.constant 0 : i32
    %c0_i32_1 = arith.constant 0 : i32
    return %arg0, %c0_i32, %c0_i32_0 : i32, i32, i32
  }
  func.func @transform_2(%arg0: i32) -> (i32, i32, i32) {
    %c0_i32 = arith.constant 0 : i32
    %c0_i32_0 = arith.constant 0 : i32
    %c0_i32_1 = arith.constant 0 : i32
    return %arg0, %c0_i32, %c0_i32_0 : i32, i32, i32
  }
  func.func @transform_3(%arg0: i32) -> (i32, i32, i32) {
    %c0_i32 = arith.constant 0 : i32
    %c0_i32_0 = arith.constant 0 : i32
    %c0_i32_1 = arith.constant 0 : i32
    return %arg0, %c0_i32, %c0_i32_0 : i32, i32, i32
  }
  func.func @transform_4(%arg0: i32) -> (i32, i32) {
    %c0_i32 = arith.constant 0 : i32
    %c0_i32_0 = arith.constant 0 : i32
    %c0_i32_1 = arith.constant 0 : i32
    return %c0_i32, %c0_i32_0 : i32, i32
  }
  func.func @transform_5(%arg0: i32) -> (i32, i32, i32) {
    %c0_i32 = arith.constant 0 : i32
    %c0_i32_0 = arith.constant 0 : i32
    %c0_i32_1 = arith.constant 0 : i32
    return %arg0, %c0_i32, %c0_i32_0 : i32, i32, i32
  }
  func.func @transform_6(%arg0: i32) -> (i32, i32, i32) {
    %c0_i32 = arith.constant 0 : i32
    %c0_i32_0 = arith.constant 0 : i32
    %c0_i32_1 = arith.constant 0 : i32
    return %arg0, %c0_i32, %c0_i32_0 : i32, i32, i32
  }
}

</mosaic_0001>

<llo_original>
// kernel: encoder_forward.1
$region0: #{encoder_forward.1}
  #allocation0 [shape = 'u32[]', space=smem, size = 0x4, offset = 0x4, fixed_abs, tag = 'smem constant byte address 0x4 - core index']
  #allocation1 [shape = 'u32[144,128]{1,0:T(1,128)}', space=vmem, size = 0x12000, scoped, tag = 'internal scratch']
  #allocation2 [shape = 'f32[64,128]{1,0:T(8,128)}', space=vmem, size = 0x8000, scoped, tag = 'scratch operand']
  #allocation3 [shape = 'f32[64,512]{1,0:T(8,128)}', space=vmem, size = 0x20000, scoped, tag = 'scratch operand']
  #allocation4 [shape = 's32[1]{0}', space=sflag, size = 0x4, scoped, tag = 'scratch operand']
  #allocation9 [shape = 's32[]', space=sflag, size = 0x4, offset = 0, fixed_abs, tag = 'sflag constant byte address 0x0 - dummy sync flag']
  %s0 = inlined_call_operand.vmem [shape: f32[64,128], index: 0, kind: input, shape index: {}]
  %s1 = inlined_call_operand.hbm [shape: f32[2,128,512], index: 1, kind: input, shape index: {}]
  %s2 = inlined_call_operand.hbm [shape: f32[2,128,512], index: 2, kind: input, shape index: {}]
  %s3 = inlined_call_operand.vmem [shape: f32[2,1,512], index: 3, kind: input, shape index: {}]
  %s4 = inlined_call_operand.vmem [shape: f32[64,128], index: 4, kind: output, shape index: {0}]
  %s5 = inlined_call_operand.vmem [shape: f32[2,8,128], index: 5, kind: output, shape index: {1}]
  %s6 = inlined_call_operand.vmem [shape: f32[2,8,128], index: 6, kind: output, shape index: {2}]
  %7 = xla_tuple %s4, %s5, %s6
  %s8 = sld [smem:[#allocation0]]
  $region111: #{encoder_forward.1} parent=0
    _
  %s10 = ssub.s32 1, %s8
  %s11 = scalar_select 0, %s10, %s8
  $region1: #{encoder_forward.1} parent=0
    #allocation5 [shape = 'u8[524288]{0}', space=vmem, size = 0x80000, scoped, tag = 'input window, operand 1']
    #allocation6 [shape = 's32[2]{0}', space=sflag, size = 0x8, scoped, tag = 'scoped memory for encoder_forward.1']
    #allocation7 [shape = 'u8[524288]{0}', space=vmem, size = 0x80000, scoped, tag = 'input window, operand 2']
    #allocation8 [shape = 's32[2]{0}', space=sflag, size = 0x8, scoped, tag = 'scoped memory for encoder_forward.1']
    %12 = vsyncpa [#allocation6], 0
    %s13 = scalar_lea.sflag [#allocation6], 1
    %14 = vsyncpa %s13, 0
    %15 = vsyncpa [#allocation8], 0
    %s16 = scalar_lea.sflag [#allocation8], 1
    %17 = vsyncpa %s16, 0
    loop: start=0, step=1, limit=4
    $region2: #{encoder_forward.1} parent=1 // loop_pre_header
      _
    $region3: #{encoder_forward.1} parent=1 // loop_header
      %s19 = sphi 0, %s23
      %p20 = scmp.ge.s32.totalorder %s19, 4
      %s29 = sphi 0, %s31
      %s32 = sphi 0, %s29
      %s33 = sphi 0, %s32
      %s49 = sphi 0, %s33
      %s55 = sphi 0, %s57
      %s58 = sphi 0, %s55
      %s59 = sphi 0, %s58
      %s75 = sphi 0, %s59
      %s81 = sphi 0, %s83
      %s84 = sphi 0, %s81
      %s85 = sphi 0, %s84
      %s101 = sphi 0, %s85
      %s105 = sphi 0, %s105
      %s107 = sphi 0, %s105
      %s108 = sphi 0, %s107
      %s122 = sphi 0, %s108
      %s128 = sphi 0, %s130
      %s131 = sphi 0, %s128
      %s132 = sphi 0, %s131
      %s148 = sphi 0, %s132
      %s154 = sphi 0, %s156
      %s157 = sphi 0, %s154
      %s158 = sphi 0, %s157
      %s174 = sphi 0, %s158
    $region4: #{encoder_forward.1} parent=1 // loop_header_branch
      %22 = sbr.rel (%p20) target = $region8
    $region5: #{encoder_forward.1} parent=1 // loop_body
      %s24 = ssub.s32 %s19, 1
      %s25 = ssub.s32 %s19, 2
      %s26 = sadd.s32 %s19, 1
      %s27 = ssub.s32 %s19, %s26
      %p28 = scmp.eq.s32.totalorder %s27, 0
      %s30 = sadd.s32 %s29, 1
      %s31 = scalar_select %p28, %s29, %s30
      %p34 = pneg %p28
      %p35 = scmp.eq.s32.totalorder %s19, 1
      %p36 = por %p34, %p35
      %p37 = scmp.ne.s32.totalorder %s29, %s32
      %p38 = scmp.eq.s32.totalorder %s19, 0
      %p39 = por %p37, %p38
      %p40 = scmp.ne.s32.totalorder %s29, %s32
      %p41 = scmp.eq.s32.totalorder %s24, 1
      %p42 = por %p40, %p41
      %p43 = scmp.ne.s32.totalorder %s32, %s33
      %p44 = scmp.eq.s32.totalorder %s24, 0
      %p45 = por %p43, %p44
      %p46 = scmp.ne.s32.totalorder %s32, %s33
      %p47 = scmp.eq.s32.totalorder %s25, 1
      %p48 = por %p46, %p47
      %p50 = scmp.ne.s32.totalorder %s33, %s49
      %p51 = scmp.eq.s32.totalorder %s25, 0
      %p52 = por %p50, %p51
      %s53 = ssub.s32 %s19, %s26
      %p54 = scmp.eq.s32.totalorder %s53, 0
      %s56 = sadd.s32 %s55, 1
      %s57 = scalar_select %p54, %s55, %s56
      %p60 = pneg %p54
      %p61 = scmp.eq.s32.totalorder %s19, 1
      %p62 = por %p60, %p61
      %p63 = scmp.ne.s32.totalorder %s55, %s58
      %p64 = scmp.eq.s32.totalorder %s19, 0
      %p65 = por %p63, %p64
      %p66 = scmp.ne.s32.totalorder %s55, %s58
      %p67 = scmp.eq.s32.totalorder %s24, 1
      %p68 = por %p66, %p67
      %p69 = scmp.ne.s32.totalorder %s58, %s59
      %p70 = scmp.eq.s32.totalorder %s24, 0
      %p71 = por %p69, %p70
      %p72 = scmp.ne.s32.totalorder %s58, %s59
      %p73 = scmp.eq.s32.totalorder %s25, 1
      %p74 = por %p72, %p73
      %p76 = scmp.ne.s32.totalorder %s59, %s75
      %p77 = scmp.eq.s32.totalorder %s25, 0
      %p78 = por %p76, %p77
      %s79 = ssub.s32 %s19, %s26
      %p80 = scmp.eq.s32.totalorder %s79, 0
      %s82 = sadd.s32 %s81, 1
      %s83 = scalar_select %p80, %s81, %s82
      %p86 = pneg %p80
      %p87 = scmp.eq.s32.totalorder %s19, 1
      %p88 = por %p86, %p87
      %p89 = scmp.ne.s32.totalorder %s81, %s84
      %p90 = scmp.eq.s32.totalorder %s19, 0
      %p91 = por %p89, %p90
      %p92 = scmp.ne.s32.totalorder %s81, %s84
      %p93 = scmp.eq.s32.totalorder %s24, 1
      %p94 = por %p92, %p93
      %p95 = scmp.ne.s32.totalorder %s84, %s85
      %p96 = scmp.eq.s32.totalorder %s24, 0
      %p97 = por %p95, %p96
      %p98 = scmp.ne.s32.totalorder %s84, %s85
      %p99 = scmp.eq.s32.totalorder %s25, 1
      %p100 = por %p98, %p99
      %p102 = scmp.ne.s32.totalorder %s85, %s101
      %p103 = scmp.eq.s32.totalorder %s25, 0
      %p104 = por %p102, %p103
      %s106 = sadd.s32 %s105, 1
      %p109 = scmp.eq.s32.totalorder %s19, 1
      %p110 = scmp.ne.s32.totalorder %s105, %s107
      %p111 = scmp.eq.s32.totalorder %s19, 0
      %p112 = por %p110, %p111
      %p113 = scmp.ne.s32.totalorder %s105, %s107
      %p114 = scmp.eq.s32.totalorder %s24, 1
      %p115 = por %p113, %p114
      %p116 = scmp.ne.s32.totalorder %s107, %s108
      %p117 = scmp.eq.s32.totalorder %s24, 0
      %p118 = por %p116, %p117
      %p119 = scmp.ne.s32.totalorder %s107, %s108
      %p120 = scmp.eq.s32.totalorder %s25, 1
      %p121 = por %p119, %p120
      %p123 = scmp.ne.s32.totalorder %s108, %s122
      %p124 = scmp.eq.s32.totalorder %s25, 0
      %p125 = por %p123, %p124
      %s126 = ssub.s32 %s19, %s26
      %p127 = scmp.eq.s32.totalorder %s126, 0
      %s129 = sadd.s32 %s128, 1
      %s130 = scalar_select %p127, %s128, %s129
      %p133 = pneg %p127
      %p134 = scmp.eq.s32.totalorder %s19, 1
      %p135 = por %p133, %p134
      %p136 = scmp.ne.s32.totalorder %s128, %s131
      %p137 = scmp.eq.s32.totalorder %s19, 0
      %p138 = por %p136, %p137
      %p139 = scmp.ne.s32.totalorder %s128, %s131
      %p140 = scmp.eq.s32.totalorder %s24, 1
      %p141 = por %p139, %p140
      %p142 = scmp.ne.s32.totalorder %s131, %s132
      %p143 = scmp.eq.s32.totalorder %s24, 0
      %p144 = por %p142, %p143
      %p145 = scmp.ne.s32.totalorder %s131, %s132
      %p146 = scmp.eq.s32.totalorder %s25, 1
      %p147 = por %p145, %p146
      %p149 = scmp.ne.s32.totalorder %s132, %s148
      %p150 = scmp.eq.s32.totalorder %s25, 0
      %p151 = por %p149, %p150
      %s152 = ssub.s32 %s19, %s26
      %p153 = scmp.eq.s32.totalorder %s152, 0
      %s155 = sadd.s32 %s154, 1
      %s156 = scalar_select %p153, %s154, %s155
      %p159 = pneg %p153
      %p160 = scmp.eq.s32.totalorder %s19, 1
      %p161 = por %p159, %p160
      %p162 = scmp.ne.s32.totalorder %s154, %s157
      %p163 = scmp.eq.s32.totalorder %s19, 0
      %p164 = por %p162, %p163
      %p165 = scmp.ne.s32.totalorder %s154, %s157
      %p166 = scmp.eq.s32.totalorder %s24, 1
      %p167 = por %p165, %p166
      %p168 = scmp.ne.s32.totalorder %s157, %s158
      %p169 = scmp.eq.s32.totalorder %s24, 0
      %p170 = por %p168, %p169
      %p171 = scmp.ne.s32.totalorder %s157, %s158
      %p172 = scmp.eq.s32.totalorder %s25, 1
      %p173 = por %p171, %p172
      %p175 = scmp.ne.s32.totalorder %s158, %s174
      %p176 = scmp.eq.s32.totalorder %s25, 0
      %p177 = por %p175, %p176
      %p178 = scmp.le.s32.totalorder 1, %s19
      %p179 = scmp.lt.s32.totalorder %s19, 3
      %p180 = pnand %p178, %p179
      %p181 = pneg %p180
      // Predicated region
      $region9: #{encoder_forward.1} parent=5 // pred_check
        _
      $region10: #{encoder_forward.1} parent=5 // pred_check_branch
        %183 = sbr.rel (%p180) target = $region12
      $region11: #{encoder_forward.1} parent=5 // pred_region
        %s184 = ssub.s32 %s19, 1
      $region12: #{encoder_forward.1} parent=5 // pred_fallthru
        _
      %p185 = scmp.lt.s32.totalorder %s19, 2
      // Predicated region
      $region13: #{encoder_forward.1} parent=5 // pred_check
        %p186 = pneg %p185
      $region14: #{encoder_forward.1} parent=5 // pred_check_branch
        %188 = sbr.rel (%p186) target = $region16
      $region15: #{encoder_forward.1} parent=5 // pred_region
        // Predicated region
        $region17: #{encoder_forward.1} parent=15 // pred_check
          %p189 = pneg %p39
        $region18: #{encoder_forward.1} parent=15 // pred_check_branch
          %191 = sbr.rel (%p189) target = $region20
        $region19: #{encoder_forward.1} parent=15 // pred_region
          %s192 = sand.u32 %s29, 1
          %s193 = scalar_lea.sflag [#allocation6], %s192
          %s194 = sand.u32 %s29, 1
          %s195 = smul.addr %s194, 512
          %s196 = scalar_lea.vmem [#allocation5], %s195
          %s198 = ssub.s32 8192, 8192
          %199 = vsyncadd %s193, %s198
          %s200 = smul.addr %s19, 64
          %s201 = smul.addr %s200, 128
          %s202 = scalar_lea.hbm %s1, %s201
          %s203 = sshll.u32 %s196, 4
          %s204 = int_to_ptr.vmem [resolvable:$true] %s203
          %209 = dma.hbm_to_vmem [thread:$0]  %s202, 8192, %s204, %s193, 512, 512, 32
        $region20: #{encoder_forward.1} parent=15 // pred_fallthru
          _
        // Predicated region
        $region21: #{encoder_forward.1} parent=15 // pred_check
          %p210 = pneg %p65
        $region22: #{encoder_forward.1} parent=15 // pred_check_branch
          %212 = sbr.rel (%p210) target = $region24
        $region23: #{encoder_forward.1} parent=15 // pred_region
          %s213 = sand.u32 %s55, 1
          %s214 = scalar_lea.sflag [#allocation8], %s213
          %s215 = sand.u32 %s55, 1
          %s216 = smul.addr %s215, 512
          %s217 = scalar_lea.vmem [#allocation7], %s216
          %s219 = ssub.s32 8192, 8192
          %220 = vsyncadd %s214, %s219
          %s221 = smul.addr %s19, 64
          %s222 = smul.addr %s221, 128
          %s223 = scalar_lea.hbm %s2, %s222
          %s224 = sshll.u32 %s217, 4
          %s225 = int_to_ptr.vmem [resolvable:$true] %s224
          %230 = dma.hbm_to_vmem [thread:$0]  %s223, 8192, %s225, %s214, 512, 512, 32
        $region24: #{encoder_forward.1} parent=15 // pred_fallthru
          _
        // Predicated region
        $region25: #{encoder_forward.1} parent=15 // pred_check
          %p231 = pneg %p91
        $region26: #{encoder_forward.1} parent=15 // pred_check_branch
          %233 = sbr.rel (%p231) target = $region28
        $region27: #{encoder_forward.1} parent=15 // pred_region
          %p234 = scmp.lt.s32.totalorder %s19, 1
          %s235 = scalar_select %p234, %s19, 1
          %s236 = smul.addr %s235, 4
          %s237 = scalar_lea.vmem %s3, %s236
        $region28: #{encoder_forward.1} parent=15 // pred_fallthru
          _
      $region16: #{encoder_forward.1} parent=5 // pred_fallthru
        _
      %p238 = scmp.le.s32.totalorder 1, %s19
      %p239 = scmp.lt.s32.totalorder %s19, 3
      %p240 = pnand %p238, %p239
      %p241 = pneg %p240
      // Predicated region
      $region29: #{encoder_forward.1} parent=5 // pred_check
        _
      $region30: #{encoder_forward.1} parent=5 // pred_check_branch
        %243 = sbr.rel (%p240) target = $region32
      $region31: #{encoder_forward.1} parent=5 // pred_region
        %s244 = ssub.s32 %s19, 1
        %s245 = sand.u32 %s32, 1
        %s246 = scalar_lea.sflag [#allocation6], %s245
        %s247 = sand.u32 %s32, 1
        %s248 = smul.addr %s247, 512
        %s249 = scalar_lea.vmem [#allocation5], %s248
        // Predicated region
        $region33: #{encoder_forward.1} parent=31 // pred_check
          %p250 = pneg %p45
        $region34: #{encoder_forward.1} parent=31 // pred_check_branch
          %252 = sbr.rel (%p250) target = $region36
        $region35: #{encoder_forward.1} parent=31 // pred_region
          %253 = dma.done %s246, 8192
        $region36: #{encoder_forward.1} parent=31 // pred_fallthru
          _
        %s254 = sand.u32 %s58, 1
        %s255 = scalar_lea.sflag [#allocation8], %s254
        %s256 = sand.u32 %s58, 1
        %s257 = smul.addr %s256, 512
        %s258 = scalar_lea.vmem [#allocation7], %s257
        // Predicated region
        $region37: #{encoder_forward.1} parent=31 // pred_check
          %p259 = pneg %p71
        $region38: #{encoder_forward.1} parent=31 // pred_check_branch
          %261 = sbr.rel (%p259) target = $region40
        $region39: #{encoder_forward.1} parent=31 // pred_region
          %262 = dma.done %s255, 8192
        $region40: #{encoder_forward.1} parent=31 // pred_fallthru
          _
        %s263 = sand.u32 %s32, 1
        %s264 = scalar_lea.sflag [#allocation6], %s263
        %s265 = sand.u32 %s32, 1
        %s266 = smul.addr %s265, 512
        %s267 = scalar_lea.vmem [#allocation5], %s266
        %p268 = pneg %p45
        %p269 = pneg %p42
        %s270 = sand.u32 %s58, 1
        %s271 = scalar_lea.sflag [#allocation8], %s270
        %s272 = sand.u32 %s58, 1
        %s273 = smul.addr %s272, 512
        %s274 = scalar_lea.vmem [#allocation7], %s273
        %p275 = pneg %p71
        %p276 = pneg %p68
        %p277 = scmp.lt.s32.totalorder %s24, 1
        %s278 = scalar_select %p277, %s24, 1
        %s279 = smul.addr %s278, 4
        %s280 = scalar_lea.vmem %s3, %s279
        %p281 = pneg %p97
        %p282 = pneg %p94
        %p283 = pneg %p118
        %p284 = pneg %p115
        %p285 = pneg %p144
        %p286 = pneg %p141
        %p287 = scmp.lt.s32.totalorder %s24, 1
        %s288 = scalar_select %p287, %s24, 1
        %s289 = smul.addr %s288, 8
        %s290 = scalar_lea.vmem %s5, %s289
        %p291 = pneg %p170
        %p292 = pneg %p167
        %p293 = scmp.lt.s32.totalorder %s24, 1
        %s294 = scalar_select %p293, %s24, 1
        %s295 = smul.addr %s294, 8
        %s296 = scalar_lea.vmem %s6, %s295
        %p297 = scmp.lt.s32.totalorder %s24, 1
        %s298 = scalar_select %p297, %s24, 1
        %s299 = smul.addr %s298, 4
        %s300 = scalar_lea.vmem %s3, %s299
        %p301 = scmp.lt.s32.totalorder %s24, 1
        %s302 = scalar_select %p301, %s24, 1
        %s303 = smul.addr %s302, 8
        %s304 = scalar_lea.vmem %s5, %s303
        %p305 = scmp.lt.s32.totalorder %s24, 1
        %s306 = scalar_select %p305, %s24, 1
        %s307 = smul.addr %s306, 8
        %s308 = scalar_lea.vmem %s6, %s307
        %p309 = scmp.eq.s32.totalorder %s24, 0
        // Predicated region
        $region41: #{encoder_forward.1} parent=31 // pred_check
          %p310 = pneg %p309
        $region42: #{encoder_forward.1} parent=31 // pred_check_branch
          %312 = sbr.rel (%p310) target = $region44
        $region43: #{encoder_forward.1} parent=31 // pred_region
          %p314 = scmp.lt.u32.totalorder 64, 8
          %p315 = pneg %p314
          // Predicated region
          $region45: #{encoder_forward.1} parent=43 // pred_check
            _
          $region46: #{encoder_forward.1} parent=43 // pred_check_branch
            %317 = sbr.rel (%p314) target = $region48
          $region47: #{encoder_forward.1} parent=43 // pred_region
            %s332 = sand.u32 64, 7
            %p333 = scmp.eq.s32.totalorder %s332, 0
            // Predicated region
            $region60: #{encoder_forward.1} parent=47 // pred_check
              %p334 = pneg %p333
            $region61: #{encoder_forward.1} parent=47 // pred_check_branch
              %336 = sbr.rel (%p334) target = $region63
            $region62: #{encoder_forward.1} parent=47 // pred_region
              loop: start=0, step=1, limit=1
              $region64: #{encoder_forward.1} parent=62 // loop_pre_header
                _
              $region65: #{encoder_forward.1} parent=62 // loop_header
                %s338 = sphi 0, %s342
                %p339 = scmp.ge.s32.totalorder %s338, 1
                %s343 = sphi %s0, %s0
                %s344 = sphi [#allocation2], [#allocation2]
              $region66: #{encoder_forward.1} parent=62 // loop_header_branch
                %341 = sbr.rel (%p339) target = $region70
              $region67: #{encoder_forward.1} parent=62 // loop_body
                %v345 = vld [vmem:[%s343] sm:$0xff]
                %346 = vst [vmem:[%s344] sm:$0xff] %v345
                %v347 = vld [vmem:[%s343 + $0x8] sm:$0xff]
                %348 = vst [vmem:[%s344 + $0x8] sm:$0xff] %v347
                %v349 = vld [vmem:[%s343 + $0x10] sm:$0xff]
                %350 = vst [vmem:[%s344 + $0x10] sm:$0xff] %v349
                %v351 = vld [vmem:[%s343 + $0x18] sm:$0xff]
                %352 = vst [vmem:[%s344 + $0x18] sm:$0xff] %v351
                %v353 = vld [vmem:[%s343 + $0x20] sm:$0xff]
                %354 = vst [vmem:[%s344 + $0x20] sm:$0xff] %v353
                %v355 = vld [vmem:[%s343 + $0x28] sm:$0xff]
                %356 = vst [vmem:[%s344 + $0x28] sm:$0xff] %v355
                %v357 = vld [vmem:[%s343 + $0x30] sm:$0xff]
                %358 = vst [vmem:[%s344 + $0x30] sm:$0xff] %v357
                %v359 = vld [vmem:[%s343 + $0x38] sm:$0xff]
                %360 = vst [vmem:[%s344 + $0x38] sm:$0xff] %v359
              $region68: #{encoder_forward.1} parent=62 // loop_footer
                %s342 = sadd.s32 1, %s338
              $region69: #{encoder_forward.1} parent=62 // loop_footer_branch
                %337 = sbr.rel target = $region65
              $region70: #{encoder_forward.1} parent=62 // loop_exit
                _
            $region63: #{encoder_forward.1} parent=47 // pred_fallthru
              _
            %p361 = pneg %p333
            // Predicated region
            $region71: #{encoder_forward.1} parent=47 // pred_check
              _
            $region72: #{encoder_forward.1} parent=47 // pred_check_branch
              %363 = sbr.rel (%p333) target = $region74
            $region73: #{encoder_forward.1} parent=47 // pred_region
              %s364 = sand.u32 64, 7
            $region74: #{encoder_forward.1} parent=47 // pred_fallthru
              _
          $region48: #{encoder_forward.1} parent=43 // pred_fallthru
            _
          // Predicated region
          $region49: #{encoder_forward.1} parent=43 // pred_check
            %p318 = pneg %p314
          $region50: #{encoder_forward.1} parent=43 // pred_check_branch
            %320 = sbr.rel (%p318) target = $region52
          $region51: #{encoder_forward.1} parent=43 // pred_region
            %s321 = sshllo.u32 0, 64
            loop: start=0, step=1, limit=1
            $region53: #{encoder_forward.1} parent=51 // loop_pre_header
              _
            $region54: #{encoder_forward.1} parent=51 // loop_header
              %s323 = sphi 0, %s327
              %p324 = scmp.ge.s32.totalorder %s323, 1
              %s328 = sphi %s0, %s0
              %s329 = sphi [#allocation2], [#allocation2]
            $region55: #{encoder_forward.1} parent=51 // loop_header_branch
              %326 = sbr.rel (%p324) target = $region59
            $region56: #{encoder_forward.1} parent=51 // loop_body
              %v330 = vld [vmem:[%s328] sm:%s321]
              %331 = vst [vmem:[%s329] sm:%s321] %v330
            $region57: #{encoder_forward.1} parent=51 // loop_footer
              %s327 = sadd.s32 1, %s323
            $region58: #{encoder_forward.1} parent=51 // loop_footer_branch
              %322 = sbr.rel target = $region54
            $region59: #{encoder_forward.1} parent=51 // loop_exit
              _
          $region52: #{encoder_forward.1} parent=43 // pred_fallthru
            _
          // Predicated region
          $region75: #{encoder_forward.1} parent=43 // pred_check
            _
          $region76: #{encoder_forward.1} parent=43 // pred_check_branch
            %367 = sbr.rel (0) target = $region78
          $region77: #{encoder_forward.1} parent=43 // pred_region
            %368 = vsyncadd [#allocation4], 1024
          $region78: #{encoder_forward.1} parent=43 // pred_fallthru
            _
          %s369 = smul.u32 64, 1
          %s370 = sshll.u32 %s369, 4
          %371 = dma.done [#allocation4], %s370
        $region44: #{encoder_forward.1} parent=31 // pred_fallthru
          _
        %v372 = vld [vmem:[%s249] sm:$0xff]
        %v373 = vld [vmem:[%s249 + $0x8] sm:$0xff]
        %v374 = vld [vmem:[%s249 + $0x10] sm:$0xff]
        %v375 = vld [vmem:[%s249 + $0x18] sm:$0xff]
        %v376 = vld [vmem:[%s249 + $0x20] sm:$0xff]
        %v377 = vld [vmem:[%s249 + $0x28] sm:$0xff]
        %v378 = vld [vmem:[%s249 + $0x30] sm:$0xff]
        %v379 = vld [vmem:[%s249 + $0x38] sm:$0xff]
        %v380 = vld [vmem:[%s249 + $0x40] sm:$0xff]
        %v381 = vld [vmem:[%s249 + $0x48] sm:$0xff]
        %v382 = vld [vmem:[%s249 + $0x50] sm:$0xff]
        %v383 = vld [vmem:[%s249 + $0x58] sm:$0xff]
        %v384 = vld [vmem:[%s249 + $0x60] sm:$0xff]
        %v385 = vld [vmem:[%s249 + $0x68] sm:$0xff]
        %v386 = vld [vmem:[%s249 + $0x70] sm:$0xff]
        %v387 = vld [vmem:[%s249 + $0x78] sm:$0xff]
        %v388 = vld [vmem:[%s249 + $0x80] sm:$0xff]
        %v389 = vld [vmem:[%s249 + $0x88] sm:$0xff]
        %v390 = vld [vmem:[%s249 + $0x90] sm:$0xff]
        %v391 = vld [vmem:[%s249 + $0x98] sm:$0xff]
        %v392 = vld [vmem:[%s249 + $0xa0] sm:$0xff]
        %v393 = vld [vmem:[%s249 + $0xa8] sm:$0xff]
        %v394 = vld [vmem:[%s249 + $0xb0] sm:$0xff]
        %v395 = vld [vmem:[%s249 + $0xb8] sm:$0xff]
        %v396 = vld [vmem:[%s249 + $0xc0] sm:$0xff]
        %v397 = vld [vmem:[%s249 + $0xc8] sm:$0xff]
        %v398 = vld [vmem:[%s249 + $0xd0] sm:$0xff]
        %v399 = vld [vmem:[%s249 + $0xd8] sm:$0xff]
        %v400 = vld [vmem:[%s249 + $0xe0] sm:$0xff]
        %v401 = vld [vmem:[%s249 + $0xe8] sm:$0xff]
        %v402 = vld [vmem:[%s249 + $0xf0] sm:$0xff]
        %v403 = vld [vmem:[%s249 + $0xf8] sm:$0xff]
        %v404 = vld [vmem:[%s249 + $0x100] sm:$0xff]
        %v405 = vld [vmem:[%s249 + $0x108] sm:$0xff]
        %v406 = vld [vmem:[%s249 + $0x110] sm:$0xff]
        %v407 = vld [vmem:[%s249 + $0x118] sm:$0xff]
        %v408 = vld [vmem:[%s249 + $0x120] sm:$0xff]
        %v409 = vld [vmem:[%s249 + $0x128] sm:$0xff]
        %v410 = vld [vmem:[%s249 + $0x130] sm:$0xff]
        %v411 = vld [vmem:[%s249 + $0x138] sm:$0xff]
        %v412 = vld [vmem:[%s249 + $0x140] sm:$0xff]
        %v413 = vld [vmem:[%s249 + $0x148] sm:$0xff]
        %v414 = vld [vmem:[%s249 + $0x150] sm:$0xff]
        %v415 = vld [vmem:[%s249 + $0x158] sm:$0xff]
        %v416 = vld [vmem:[%s249 + $0x160] sm:$0xff]
        %v417 = vld [vmem:[%s249 + $0x168] sm:$0xff]
        %v418 = vld [vmem:[%s249 + $0x170] sm:$0xff]
        %v419 = vld [vmem:[%s249 + $0x178] sm:$0xff]
        %v420 = vld [vmem:[%s249 + $0x180] sm:$0xff]
        %v421 = vld [vmem:[%s249 + $0x188] sm:$0xff]
        %v422 = vld [vmem:[%s249 + $0x190] sm:$0xff]
        %v423 = vld [vmem:[%s249 + $0x198] sm:$0xff]
        %v424 = vld [vmem:[%s249 + $0x1a0] sm:$0xff]
        %v425 = vld [vmem:[%s249 + $0x1a8] sm:$0xff]
        %v426 = vld [vmem:[%s249 + $0x1b0] sm:$0xff]
        %v427 = vld [vmem:[%s249 + $0x1b8] sm:$0xff]
        %v428 = vld [vmem:[%s249 + $0x1c0] sm:$0xff]
        %v429 = vld [vmem:[%s249 + $0x1c8] sm:$0xff]
        %v430 = vld [vmem:[%s249 + $0x1d0] sm:$0xff]
        %v431 = vld [vmem:[%s249 + $0x1d8] sm:$0xff]
        %v432 = vld [vmem:[%s249 + $0x1e0] sm:$0xff]
        %v433 = vld [vmem:[%s249 + $0x1e8] sm:$0xff]
        %v434 = vld [vmem:[%s249 + $0x1f0] sm:$0xff]
        %v435 = vld [vmem:[%s249 + $0x1f8] sm:$0xff]
        %v436 = vld [vmem:[%s258] sm:$0xff]
        %v437 = vld [vmem:[%s258 + $0x8] sm:$0xff]
        %v438 = vld [vmem:[%s258 + $0x10] sm:$0xff]
        %v439 = vld [vmem:[%s258 + $0x18] sm:$0xff]
        %v440 = vld [vmem:[%s258 + $0x20] sm:$0xff]
        %v441 = vld [vmem:[%s258 + $0x28] sm:$0xff]
        %v442 = vld [vmem:[%s258 + $0x30] sm:$0xff]
        %v443 = vld [vmem:[%s258 + $0x38] sm:$0xff]
        %v444 = vld [vmem:[%s258 + $0x40] sm:$0xff]
        %v445 = vld [vmem:[%s258 + $0x48] sm:$0xff]
        %v446 = vld [vmem:[%s258 + $0x50] sm:$0xff]
        %v447 = vld [vmem:[%s258 + $0x58] sm:$0xff]
        %v448 = vld [vmem:[%s258 + $0x60] sm:$0xff]
        %v449 = vld [vmem:[%s258 + $0x68] sm:$0xff]
        %v450 = vld [vmem:[%s258 + $0x70] sm:$0xff]
        %v451 = vld [vmem:[%s258 + $0x78] sm:$0xff]
        %v452 = vld [vmem:[%s258 + $0x80] sm:$0xff]
        %v453 = vld [vmem:[%s258 + $0x88] sm:$0xff]
        %v454 = vld [vmem:[%s258 + $0x90] sm:$0xff]
        %v455 = vld [vmem:[%s258 + $0x98] sm:$0xff]
        %v456 = vld [vmem:[%s258 + $0xa0] sm:$0xff]
        %v457 = vld [vmem:[%s258 + $0xa8] sm:$0xff]
        %v458 = vld [vmem:[%s258 + $0xb0] sm:$0xff]
        %v459 = vld [vmem:[%s258 + $0xb8] sm:$0xff]
        %v460 = vld [vmem:[%s258 + $0xc0] sm:$0xff]
        %v461 = vld [vmem:[%s258 + $0xc8] sm:$0xff]
        %v462 = vld [vmem:[%s258 + $0xd0] sm:$0xff]
        %v463 = vld [vmem:[%s258 + $0xd8] sm:$0xff]
        %v464 = vld [vmem:[%s258 + $0xe0] sm:$0xff]
        %v465 = vld [vmem:[%s258 + $0xe8] sm:$0xff]
        %v466 = vld [vmem:[%s258 + $0xf0] sm:$0xff]
        %v467 = vld [vmem:[%s258 + $0xf8] sm:$0xff]
        %v468 = vld [vmem:[%s258 + $0x100] sm:$0xff]
        %v469 = vld [vmem:[%s258 + $0x108] sm:$0xff]
        %v470 = vld [vmem:[%s258 + $0x110] sm:$0xff]
        %v471 = vld [vmem:[%s258 + $0x118] sm:$0xff]
        %v472 = vld [vmem:[%s258 + $0x120] sm:$0xff]
        %v473 = vld [vmem:[%s258 + $0x128] sm:$0xff]
        %v474 = vld [vmem:[%s258 + $0x130] sm:$0xff]
        %v475 = vld [vmem:[%s258 + $0x138] sm:$0xff]
        %v476 = vld [vmem:[%s258 + $0x140] sm:$0xff]
        %v477 = vld [vmem:[%s258 + $0x148] sm:$0xff]
        %v478 = vld [vmem:[%s258 + $0x150] sm:$0xff]
        %v479 = vld [vmem:[%s258 + $0x158] sm:$0xff]
        %v480 = vld [vmem:[%s258 + $0x160] sm:$0xff]
        %v481 = vld [vmem:[%s258 + $0x168] sm:$0xff]
        %v482 = vld [vmem:[%s258 + $0x170] sm:$0xff]
        %v483 = vld [vmem:[%s258 + $0x178] sm:$0xff]
        %v484 = vld [vmem:[%s258 + $0x180] sm:$0xff]
        %v485 = vld [vmem:[%s258 + $0x188] sm:$0xff]
        %v486 = vld [vmem:[%s258 + $0x190] sm:$0xff]
        %v487 = vld [vmem:[%s258 + $0x198] sm:$0xff]
        %v488 = vld [vmem:[%s258 + $0x1a0] sm:$0xff]
        %v489 = vld [vmem:[%s258 + $0x1a8] sm:$0xff]
        %v490 = vld [vmem:[%s258 + $0x1b0] sm:$0xff]
        %v491 = vld [vmem:[%s258 + $0x1b8] sm:$0xff]
        %v492 = vld [vmem:[%s258 + $0x1c0] sm:$0xff]
        %v493 = vld [vmem:[%s258 + $0x1c8] sm:$0xff]
        %v494 = vld [vmem:[%s258 + $0x1d0] sm:$0xff]
        %v495 = vld [vmem:[%s258 + $0x1d8] sm:$0xff]
        %v496 = vld [vmem:[%s258 + $0x1e0] sm:$0xff]
        %v497 = vld [vmem:[%s258 + $0x1e8] sm:$0xff]
        %v498 = vld [vmem:[%s258 + $0x1f0] sm:$0xff]
        %v499 = vld [vmem:[%s258 + $0x1f8] sm:$0xff]
        %v500 = vld [vmem:[%s300] sm:$0xf]
        %v501 = vld [vmem:[#allocation2] sm:$0xff]
        %v502 = vld [vmem:[#allocation2 + $0x8] sm:$0xff]
        %v503 = vld [vmem:[#allocation2 + $0x10] sm:$0xff]
        %v504 = vld [vmem:[#allocation2 + $0x18] sm:$0xff]
        %v505 = vld [vmem:[#allocation2 + $0x20] sm:$0xff]
        %v506 = vld [vmem:[#allocation2 + $0x28] sm:$0xff]
        %v507 = vld [vmem:[#allocation2 + $0x30] sm:$0xff]
        %v508 = vld [vmem:[#allocation2 + $0x38] sm:$0xff]
        %v510 = vlaneseq
        %v511 = vshrl.u32 %v510, 7
        %v512 = vsub.s32 0, %v511
        %v513 = vrot.slane %v500, %v512
        %v514 = vlaneseq
        %v515 = vshrl.u32 %v514, 7
        %v516 = vsub.s32 1, %v515
        %v517 = vrot.slane %v500, %v516
        %v518 = vlaneseq
        %v519 = vshrl.u32 %v518, 7
        %v520 = vsub.s32 2, %v519
        %v521 = vrot.slane %v500, %v520
        %v522 = vlaneseq
        %v523 = vshrl.u32 %v522, 7
        %v524 = vsub.s32 3, %v523
        %v525 = vrot.slane %v500, %v524
        %530 = vmatprep.subr.mxu0 %v373
        %531 = vmatpush1.msra.mxu0 %v372
        %532 = vmatprep.subr.mxu0 %v377
        %533 = vmatpush1.msra.mxu0 %v376
        %534 = vmatprep.subr.mxu0 %v381
        %535 = vmatpush1.msra.mxu0 %v380
        %536 = vmatprep.subr.mxu0 %v385
        %537 = vmatpush1.msra.mxu0 %v384
        %538 = vmatprep.subr.mxu0 %v389
        %539 = vmatpush1.msra.mxu0 %v388
        %540 = vmatprep.subr.mxu0 %v393
        %541 = vmatpush1.msra.mxu0 %v392
        %542 = vmatprep.subr.mxu0 %v397
        %543 = vmatpush1.msra.mxu0 %v396
        %544 = vmatprep.subr.mxu0 %v401
        %545 = vmatpush1.msra.mxu0 %v400
        %546 = vmatprep.subr.mxu0 %v405
        %547 = vmatpush1.msra.mxu0 %v404
        %548 = vmatprep.subr.mxu0 %v409
        %549 = vmatpush1.msra.mxu0 %v408
        %550 = vmatprep.subr.mxu0 %v413
        %551 = vmatpush1.msra.mxu0 %v412
        %552 = vmatprep.subr.mxu0 %v417
        %553 = vmatpush1.msra.mxu0 %v416
        %554 = vmatprep.subr.mxu0 %v421
        %555 = vmatpush1.msra.mxu0 %v420
        %556 = vmatprep.subr.mxu0 %v425
        %557 = vmatpush1.msra.mxu0 %v424
        %558 = vmatprep.subr.mxu0 %v429
        %559 = vmatpush1.msra.mxu0 %v428
        %560 = vmatprep.subr.mxu0 %v433
        %561 = vmatpush1.msra.mxu0 %v432
        %562 = vmatprep.subr.mxu0 0.0
        %563 = vmatpush1.msra.mxu0 0.0
        %564 = vmatprep.subr.mxu0 0.0
        %565 = vmatpush1.msra.mxu0 0.0
        %566 = vmatprep.subr.mxu0 0.0
        %567 = vmatpush1.msra.mxu0 0.0
        %568 = vmatprep.subr.mxu0 0.0
        %569 = vmatpush1.msra.mxu0 0.0
        %570 = vmatprep.subr.mxu0 0.0
        %571 = vmatpush1.msra.mxu0 0.0
        %572 = vmatprep.subr.mxu0 0.0
        %573 = vmatpush1.msra.mxu0 0.0
        %574 = vmatprep.subr.mxu0 0.0
        %575 = vmatpush1.msra.mxu0 0.0
        %576 = vmatprep.subr.mxu0 0.0
        %577 = vmatpush1.msra.mxu0 0.0
        %578 = vmatprep.subr.mxu0 0.0
        %579 = vmatpush1.msra.mxu0 0.0
        %580 = vmatprep.subr.mxu0 0.0
        %581 = vmatpush1.msra.mxu0 0.0
        %582 = vmatprep.subr.mxu0 0.0
        %583 = vmatpush1.msra.mxu0 0.0
        %584 = vmatprep.subr.mxu0 0.0
        %585 = vmatpush1.msra.mxu0 0.0
        %586 = vmatprep.subr.mxu0 0.0
        %587 = vmatpush1.msra.mxu0 0.0
        %588 = vmatprep.subr.mxu0 0.0
        %589 = vmatpush1.msra.mxu0 0.0
        %590 = vmatprep.subr.mxu0 0.0
        %591 = vmatpush1.msra.mxu0 0.0
        %592 = vmatprep.subr.mxu0 0.0
        %593 = vmatpush1.msra.mxu0 0.0
        %594 = vmatprep.mubr.f32.mxu0 0.0
        %595 = vmatmul.mubr.f32.gmra.mrb[0].mxu0 %v501
        %v596 = vpop.f32.mrb[0].mxu0
        %v597 = vadd.f32 %v513, %v596
        %v598 = vpop.f32.mrb[0].mxu0
        %v599 = vadd.f32 %v517, %v598
        %600 = vmatprep.mubr.f32.mxu0 0.0
        %601 = vmatmul.mubr.f32.gmra.mrb[0].mxu0 %v502
        %v602 = vpop.f32.mrb[0].mxu0
        %v603 = vadd.f32 %v513, %v602
        %v604 = vpop.f32.mrb[0].mxu0
        %v605 = vadd.f32 %v517, %v604
        %606 = vmatprep.mubr.f32.mxu0 0.0
        %607 = vmatmul.mubr.f32.gmra.mrb[0].mxu0 %v503
        %v608 = vpop.f32.mrb[0].mxu0
        %v609 = vadd.f32 %v513, %v608
        %v610 = vpop.f32.mrb[0].mxu0
        %v611 = vadd.f32 %v517, %v610
        %612 = vmatprep.mubr.f32.mxu0 0.0
        %613 = vmatmul.mubr.f32.gmra.mrb[0].mxu0 %v504
        %v614 = vpop.f32.mrb[0].mxu0
        %v615 = vadd.f32 %v513, %v614
        %v616 = vpop.f32.mrb[0].mxu0
        %v617 = vadd.f32 %v517, %v616
        %618 = vmatprep.mubr.f32.mxu0 0.0
        %619 = vmatmul.mubr.f32.gmra.mrb[0].mxu0 %v505
        %v620 = vpop.f32.mrb[0].mxu0
        %v621 = vadd.f32 %v513, %v620
        %v622 = vpop.f32.mrb[0].mxu0
        %v623 = vadd.f32 %v517, %v622
        %624 = vmatprep.mubr.f32.mxu0 0.0
        %625 = vmatmul.mubr.f32.gmra.mrb[0].mxu0 %v506
        %v626 = vpop.f32.mrb[0].mxu0
        %v627 = vadd.f32 %v513, %v626
        %v628 = vpop.f32.mrb[0].mxu0
        %v629 = vadd.f32 %v517, %v628
        %630 = vmatprep.mubr.f32.mxu0 0.0
        %631 = vmatmul.mubr.f32.gmra.mrb[0].mxu0 %v507
        %v632 = vpop.f32.mrb[0].mxu0
        %v633 = vadd.f32 %v513, %v632
        %v634 = vpop.f32.mrb[0].mxu0
        %v635 = vadd.f32 %v517, %v634
        %636 = vmatprep.mubr.f32.mxu0 0.0
        %637 = vmatmul.mubr.f32.gmra.mrb[0].mxu0 %v508
        %v638 = vpop.f32.mrb[0].mxu0
        %v639 = vadd.f32 %v513, %v638
        %v640 = vpop.f32.mrb[0].mxu0
        %v641 = vadd.f32 %v517, %v640
        %642 = vdwg.mxu0
        %643 = vmatprep.subr.mxu0 %v375
        %644 = vmatpush1.msra.mxu0 %v374
        %645 = vmatprep.subr.mxu0 %v379
        %646 = vmatpush1.msra.mxu0 %v378
        %647 = vmatprep.subr.mxu0 %v383
        %648 = vmatpush1.msra.mxu0 %v382
        %649 = vmatprep.subr.mxu0 %v387
        %650 = vmatpush1.msra.mxu0 %v386
        %651 = vmatprep.subr.mxu0 %v391
        %652 = vmatpush1.msra.mxu0 %v390
        %653 = vmatprep.subr.mxu0 %v395
        %654 = vmatpush1.msra.mxu0 %v394
        %655 = vmatprep.subr.mxu0 %v399
        %656 = vmatpush1.msra.mxu0 %v398
        %657 = vmatprep.subr.mxu0 %v403
        %658 = vmatpush1.msra.mxu0 %v402
        %659 = vmatprep.subr.mxu0 %v407
        %660 = vmatpush1.msra.mxu0 %v406
        %661 = vmatprep.subr.mxu0 %v411
        %662 = vmatpush1.msra.mxu0 %v410
        %663 = vmatprep.subr.mxu0 %v415
        %664 = vmatpush1.msra.mxu0 %v414
        %665 = vmatprep.subr.mxu0 %v419
        %666 = vmatpush1.msra.mxu0 %v418
        %667 = vmatprep.subr.mxu0 %v423
        %668 = vmatpush1.msra.mxu0 %v422
        %669 = vmatprep.subr.mxu0 %v427
        %670 = vmatpush1.msra.mxu0 %v426
        %671 = vmatprep.subr.mxu0 %v431
        %672 = vmatpush1.msra.mxu0 %v430
        %673 = vmatprep.subr.mxu0 %v435
        %674 = vmatpush1.msra.mxu0 %v434
        %675 = vmatprep.subr.mxu0 0.0
        %676 = vmatpush1.msra.mxu0 0.0
        %677 = vmatprep.subr.mxu0 0.0
        %678 = vmatpush1.msra.mxu0 0.0
        %679 = vmatprep.subr.mxu0 0.0
        %680 = vmatpush1.msra.mxu0 0.0
        %681 = vmatprep.subr.mxu0 0.0
        %682 = vmatpush1.msra.mxu0 0.0
        %683 = vmatprep.subr.mxu0 0.0
        %684 = vmatpush1.msra.mxu0 0.0
        %685 = vmatprep.subr.mxu0 0.0
        %686 = vmatpush1.msra.mxu0 0.0
        %687 = vmatprep.subr.mxu0 0.0
        %688 = vmatpush1.msra.mxu0 0.0
        %689 = vmatprep.subr.mxu0 0.0
        %690 = vmatpush1.msra.mxu0 0.0
        %691 = vmatprep.subr.mxu0 0.0
        %692 = vmatpush1.msra.mxu0 0.0
        %693 = vmatprep.subr.mxu0 0.0
        %694 = vmatpush1.msra.mxu0 0.0
        %695 = vmatprep.subr.mxu0 0.0
        %696 = vmatpush1.msra.mxu0 0.0
        %697 = vmatprep.subr.mxu0 0.0
        %698 = vmatpush1.msra.mxu0 0.0
        %699 = vmatprep.subr.mxu0 0.0
        %700 = vmatpush1.msra.mxu0 0.0
        %701 = vmatprep.subr.mxu0 0.0
        %702 = vmatpush1.msra.mxu0 0.0
        %703 = vmatprep.subr.mxu0 0.0
        %704 = vmatpush1.msra.mxu0 0.0
        %705 = vmatprep.subr.mxu0 0.0
        %706 = vmatpush1.msra.mxu0 0.0
        %707 = vmatprep.mubr.f32.mxu0 0.0
        %708 = vmatmul.mubr.f32.gmra.mrb[0].mxu0 %v501
        %v709 = vpop.f32.mrb[0].mxu0
        %v710 = vadd.f32 %v521, %v709
        %v711 = vpop.f32.mrb[0].mxu0
        %v712 = vadd.f32 %v525, %v711
        %713 = vmatprep.mubr.f32.mxu0 0.0
        %714 = vmatmul.mubr.f32.gmra.mrb[0].mxu0 %v502
        %v715 = vpop.f32.mrb[0].mxu0
        %v716 = vadd.f32 %v521, %v715
        %v717 = vpop.f32.mrb[0].mxu0
        %v718 = vadd.f32 %v525, %v717
        %719 = vmatprep.mubr.f32.mxu0 0.0
        %720 = vmatmul.mubr.f32.gmra.mrb[0].mxu0 %v503
        %v721 = vpop.f32.mrb[0].mxu0
        %v722 = vadd.f32 %v521, %v721
        %v723 = vpop.f32.mrb[0].mxu0
        %v724 = vadd.f32 %v525, %v723
        %725 = vmatprep.mubr.f32.mxu0 0.0
        %726 = vmatmul.mubr.f32.gmra.mrb[0].mxu0 %v504
        %v727 = vpop.f32.mrb[0].mxu0
        %v728 = vadd.f32 %v521, %v727
        %v729 = vpop.f32.mrb[0].mxu0
        %v730 = vadd.f32 %v525, %v729
        %731 = vmatprep.mubr.f32.mxu0 0.0
        %732 = vmatmul.mubr.f32.gmra.mrb[0].mxu0 %v505
        %v733 = vpop.f32.mrb[0].mxu0
        %v734 = vadd.f32 %v521, %v733
        %v735 = vpop.f32.mrb[0].mxu0
        %v736 = vadd.f32 %v525, %v735
        %737 = vmatprep.mubr.f32.mxu0 0.0
        %738 = vmatmul.mubr.f32.gmra.mrb[0].mxu0 %v506
        %v739 = vpop.f32.mrb[0].mxu0
        %v740 = vadd.f32 %v521, %v739
        %v741 = vpop.f32.mrb[0].mxu0
        %v742 = vadd.f32 %v525, %v741
        %743 = vmatprep.mubr.f32.mxu0 0.0
        %744 = vmatmul.mubr.f32.gmra.mrb[0].mxu0 %v507
        %v745 = vpop.f32.mrb[0].mxu0
        %v746 = vadd.f32 %v521, %v745
        %v747 = vpop.f32.mrb[0].mxu0
        %v748 = vadd.f32 %v525, %v747
        %749 = vmatprep.mubr.f32.mxu0 0.0
        %750 = vmatmul.mubr.f32.gmra.mrb[0].mxu0 %v508
        %v751 = vpop.f32.mrb[0].mxu0
        %v752 = vadd.f32 %v521, %v751
        %v753 = vpop.f32.mrb[0].mxu0
        %v754 = vadd.f32 %v525, %v753
        %755 = vdwg.mxu0
        %756 = vst [vmem:[#allocation3] sm:$0xff] %v597
        %757 = vst [vmem:[#allocation3 + $0x8] sm:$0xff] %v599
        %758 = vst [vmem:[#allocation3 + $0x10] sm:$0xff] %v710
        %759 = vst [vmem:[#allocation3 + $0x18] sm:$0xff] %v712
        %760 = vst [vmem:[#allocation3 + $0x20] sm:$0xff] %v603
        %761 = vst [vmem:[#allocation3 + $0x28] sm:$0xff] %v605
        %762 = vst [vmem:[#allocation3 + $0x30] sm:$0xff] %v716
        %763 = vst [vmem:[#allocation3 + $0x38] sm:$0xff] %v718
        %764 = vst [vmem:[#allocation3 + $0x40] sm:$0xff] %v609
        %765 = vst [vmem:[#allocation3 + $0x48] sm:$0xff] %v611
        %766 = vst [vmem:[#allocation3 + $0x50] sm:$0xff] %v722
        %767 = vst [vmem:[#allocation3 + $0x58] sm:$0xff] %v724
        %768 = vst [vmem:[#allocation3 + $0x60] sm:$0xff] %v615
        %769 = vst [vmem:[#allocation3 + $0x68] sm:$0xff] %v617
        %770 = vst [vmem:[#allocation3 + $0x70] sm:$0xff] %v728
        %771 = vst [vmem:[#allocation3 + $0x78] sm:$0xff] %v730
        %772 = vst [vmem:[#allocation3 + $0x80] sm:$0xff] %v621
        %773 = vst [vmem:[#allocation3 + $0x88] sm:$0xff] %v623
        %774 = vst [vmem:[#allocation3 + $0x90] sm:$0xff] %v734
        %775 = vst [vmem:[#allocation3 + $0x98] sm:$0xff] %v736
        %776 = vst [vmem:[#allocation3 + $0xa0] sm:$0xff] %v627
        %777 = vst [vmem:[#allocation3 + $0xa8] sm:$0xff] %v629
        %778 = vst [vmem:[#allocation3 + $0xb0] sm:$0xff] %v740
        %779 = vst [vmem:[#allocation3 + $0xb8] sm:$0xff] %v742
        %780 = vst [vmem:[#allocation3 + $0xc0] sm:$0xff] %v633
        %781 = vst [vmem:[#allocation3 + $0xc8] sm:$0xff] %v635
        %782 = vst [vmem:[#allocation3 + $0xd0] sm:$0xff] %v746
        %783 = vst [vmem:[#allocation3 + $0xd8] sm:$0xff] %v748
        %784 = vst [vmem:[#allocation3 + $0xe0] sm:$0xff] %v639
        %785 = vst [vmem:[#allocation3 + $0xe8] sm:$0xff] %v641
        %786 = vst [vmem:[#allocation3 + $0xf0] sm:$0xff] %v752
        %787 = vst [vmem:[#allocation3 + $0xf8] sm:$0xff] %v754
        %s788 = smul.u32 0, 4
        %s789 = smul.addr %s788, 8
        %s790 = scalar_lea.vmem [#allocation3], %s789
        %v791 = vld [vmem:[%s790] sm:$0xff]
        %v792 = vld [vmem:[%s790 + $0x8] sm:$0xff]
        %v793 = vld [vmem:[%s790 + $0x10] sm:$0xff]
        %v794 = vld [vmem:[%s790 + $0x18] sm:$0xff]
        %795 = vmatprep.subr.mxu0 %v437
        %796 = vmatpush1.msra.mxu0 %v436
        %797 = vmatprep.subr.mxu0 %v441
        %798 = vmatpush1.msra.mxu0 %v440
        %799 = vmatprep.subr.mxu0 %v445
        %800 = vmatpush1.msra.mxu0 %v444
        %801 = vmatprep.subr.mxu0 %v449
        %802 = vmatpush1.msra.mxu0 %v448
        %803 = vmatprep.subr.mxu0 %v453
        %804 = vmatpush1.msra.mxu0 %v452
        %805 = vmatprep.subr.mxu0 %v457
        %806 = vmatpush1.msra.mxu0 %v456
        %807 = vmatprep.subr.mxu0 %v461
        %808 = vmatpush1.msra.mxu0 %v460
        %809 = vmatprep.subr.mxu0 %v465
        %810 = vmatpush1.msra.mxu0 %v464
        %811 = vmatprep.subr.mxu0 %v469
        %812 = vmatpush1.msra.mxu0 %v468
        %813 = vmatprep.subr.mxu0 %v473
        %814 = vmatpush1.msra.mxu0 %v472
        %815 = vmatprep.subr.mxu0 %v477
        %816 = vmatpush1.msra.mxu0 %v476
        %817 = vmatprep.subr.mxu0 %v481
        %818 = vmatpush1.msra.mxu0 %v480
        %819 = vmatprep.subr.mxu0 %v485
        %820 = vmatpush1.msra.mxu0 %v484
        %821 = vmatprep.subr.mxu0 %v489
        %822 = vmatpush1.msra.mxu0 %v488
        %823 = vmatprep.subr.mxu0 %v493
        %824 = vmatpush1.msra.mxu0 %v492
        %825 = vmatprep.subr.mxu0 %v497
        %826 = vmatpush1.msra.mxu0 %v496
        %827 = vmatprep.subr.mxu0 0.0
        %828 = vmatpush1.msra.mxu0 0.0
        %829 = vmatprep.subr.mxu0 0.0
        %830 = vmatpush1.msra.mxu0 0.0
        %831 = vmatprep.subr.mxu0 0.0
        %832 = vmatpush1.msra.mxu0 0.0
        %833 = vmatprep.subr.mxu0 0.0
        %834 = vmatpush1.msra.mxu0 0.0
        %835 = vmatprep.subr.mxu0 0.0
        %836 = vmatpush1.msra.mxu0 0.0
        %837 = vmatprep.subr.mxu0 0.0
        %838 = vmatpush1.msra.mxu0 0.0
        %839 = vmatprep.subr.mxu0 0.0
        %840 = vmatpush1.msra.mxu0 0.0
        %841 = vmatprep.subr.mxu0 0.0
        %842 = vmatpush1.msra.mxu0 0.0
        %843 = vmatprep.subr.mxu0 0.0
        %844 = vmatpush1.msra.mxu0 0.0
        %845 = vmatprep.subr.mxu0 0.0
        %846 = vmatpush1.msra.mxu0 0.0
        %847 = vmatprep.subr.mxu0 0.0
        %848 = vmatpush1.msra.mxu0 0.0
        %849 = vmatprep.subr.mxu0 0.0
        %850 = vmatpush1.msra.mxu0 0.0
        %851 = vmatprep.subr.mxu0 0.0
        %852 = vmatpush1.msra.mxu0 0.0
        %853 = vmatprep.subr.mxu0 0.0
        %854 = vmatpush1.msra.mxu0 0.0
        %855 = vmatprep.subr.mxu0 0.0
        %856 = vmatpush1.msra.mxu0 0.0
        %857 = vmatprep.subr.mxu0 0.0
        %858 = vmatpush1.msra.mxu0 0.0
        %859 = vmatprep.mubr.f32.mxu0 0.0
        %860 = vmatmul.mubr.f32.gmra.mrb[0].mxu0 0.0
        %v861 = vpop.f32.mrb[0].mxu0
        %v862 = vadd.f32 0.0, %v861
        %v863 = vpop.f32.mrb[0].mxu0
        %v864 = vadd.f32 0.0, %v863
        %865 = vdwg.mxu0
        %866 = vmatprep.subr.mxu0 %v439
        %867 = vmatpush1.msra.mxu0 %v438
        %868 = vmatprep.subr.mxu0 %v443
        %869 = vmatpush1.msra.mxu0 %v442
        %870 = vmatprep.subr.mxu0 %v447
        %871 = vmatpush1.msra.mxu0 %v446
        %872 = vmatprep.subr.mxu0 %v451
        %873 = vmatpush1.msra.mxu0 %v450
        %874 = vmatprep.subr.mxu0 %v455
        %875 = vmatpush1.msra.mxu0 %v454
        %876 = vmatprep.subr.mxu0 %v459
        %877 = vmatpush1.msra.mxu0 %v458
        %878 = vmatprep.subr.mxu0 %v463
        %879 = vmatpush1.msra.mxu0 %v462
        %880 = vmatprep.subr.mxu0 %v467
        %881 = vmatpush1.msra.mxu0 %v466
        %882 = vmatprep.subr.mxu0 %v471
        %883 = vmatpush1.msra.mxu0 %v470
        %884 = vmatprep.subr.mxu0 %v475
        %885 = vmatpush1.msra.mxu0 %v474
        %886 = vmatprep.subr.mxu0 %v479
        %887 = vmatpush1.msra.mxu0 %v478
        %888 = vmatprep.subr.mxu0 %v483
        %889 = vmatpush1.msra.mxu0 %v482
        %890 = vmatprep.subr.mxu0 %v487
        %891 = vmatpush1.msra.mxu0 %v486
        %892 = vmatprep.subr.mxu0 %v491
        %893 = vmatpush1.msra.mxu0 %v490
        %894 = vmatprep.subr.mxu0 %v495
        %895 = vmatpush1.msra.mxu0 %v494
        %896 = vmatprep.subr.mxu0 %v499
        %897 = vmatpush1.msra.mxu0 %v498
        %898 = vmatprep.subr.mxu0 0.0
        %899 = vmatpush1.msra.mxu0 0.0
        %900 = vmatprep.subr.mxu0 0.0
        %901 = vmatpush1.msra.mxu0 0.0
        %902 = vmatprep.subr.mxu0 0.0
        %903 = vmatpush1.msra.mxu0 0.0
        %904 = vmatprep.subr.mxu0 0.0
        %905 = vmatpush1.msra.mxu0 0.0
        %906 = vmatprep.subr.mxu0 0.0
        %907 = vmatpush1.msra.mxu0 0.0
        %908 = vmatprep.subr.mxu0 0.0
        %909 = vmatpush1.msra.mxu0 0.0
        %910 = vmatprep.subr.mxu0 0.0
        %911 = vmatpush1.msra.mxu0 0.0
        %912 = vmatprep.subr.mxu0 0.0
        %913 = vmatpush1.msra.mxu0 0.0
        %914 = vmatprep.subr.mxu0 0.0
        %915 = vmatpush1.msra.mxu0 0.0
        %916 = vmatprep.subr.mxu0 0.0
        %917 = vmatpush1.msra.mxu0 0.0
        %918 = vmatprep.subr.mxu0 0.0
        %919 = vmatpush1.msra.mxu0 0.0
        %920 = vmatprep.subr.mxu0 0.0
        %921 = vmatpush1.msra.mxu0 0.0
        %922 = vmatprep.subr.mxu0 0.0
        %923 = vmatpush1.msra.mxu0 0.0
        %924 = vmatprep.subr.mxu0 0.0
        %925 = vmatpush1.msra.mxu0 0.0
        %926 = vmatprep.subr.mxu0 0.0
        %927 = vmatpush1.msra.mxu0 0.0
        %928 = vmatprep.subr.mxu0 0.0
        %929 = vmatpush1.msra.mxu0 0.0
        %930 = vmatprep.mubr.f32.mxu0 0.0
        %931 = vmatmul.mubr.f32.gmra.mrb[0].mxu0 0.0
        %v932 = vpop.f32.mrb[0].mxu0
        %v933 = vadd.f32 0.0, %v932
        %v934 = vpop.f32.mrb[0].mxu0
        %v935 = vadd.f32 0.0, %v934
        %936 = vdwg.mxu0
        %v937 = vadd.f32 %v791, %v862
        %v938 = vadd.f32 %v792, %v864
        %v939 = vadd.f32 %v793, %v933
        %v940 = vadd.f32 %v794, %v935
        %v941 = vxor.u32 %v937, 2147483648
        %v942 = vxor.u32 %v938, 2147483648
        %v943 = vxor.u32 %v939, 2147483648
        %v944 = vmul.f32 %v941, 1.442695
        %v945 = vpow.pop %v944
        %v946 = vmul.f32 %v942, 1.442695
        %v947 = vpow.pop %v946
        %v948 = vmul.f32 %v943, 1.442695
        %v949 = vpow.pop %v948
        %v950 = vadd.f32 %v945, 1.0
        %v951 = vadd.f32 %v947, 1.0
        %v952 = vadd.f32 %v949, 1.0
        %v953 = vrcp.pop %v950
        %v954 = vmul.f32 1.0, %v953
        %v955 = vrcp.pop %v951
        %v956 = vmul.f32 1.0, %v955
        %v957 = vrcp.pop %v952
        %v958 = vmul.f32 1.0, %v957
        %v959 = vtanh.pop %v940
        %v960 = vmul.f32 %v956, 0.0
        %v961 = vmul.f32 %v954, %v959
        %v962 = vadd.f32 %v960, %v961
        %v963 = vtanh.pop %v962
        %v964 = vmul.f32 %v958, %v963
        %s965 = sadd.s32 0, 0
        %s966 = scalar_lea.vmem [#allocation2], %s965
        %967 = vst [vmem:[%s966] sm:$0xff] %v964
        %s968 = smul.u32 1, 4
        %s969 = smul.addr %s968, 8
        %s970 = scalar_lea.vmem [#allocation3], %s969
        %v971 = vld [vmem:[%s970] sm:$0xff]
        %v972 = vld [vmem:[%s970 + $0x8] sm:$0xff]
        %v973 = vld [vmem:[%s970 + $0x10] sm:$0xff]
        %v974 = vld [vmem:[%s970 + $0x18] sm:$0xff]
        %975 = vmatprep.subr.mxu0 %v437
        %976 = vmatpush1.msra.mxu0 %v436
        %977 = vmatprep.subr.mxu0 %v441
        %978 = vmatpush1.msra.mxu0 %v440
        %979 = vmatprep.subr.mxu0 %v445
        %980 = vmatpush1.msra.mxu0 %v444
        %981 = vmatprep.subr.mxu0 %v449
        %982 = vmatpush1.msra.mxu0 %v448
        %983 = vmatprep.subr.mxu0 %v453
        %984 = vmatpush1.msra.mxu0 %v452
        %985 = vmatprep.subr.mxu0 %v457
        %986 = vmatpush1.msra.mxu0 %v456
        %987 = vmatprep.subr.mxu0 %v461
        %988 = vmatpush1.msra.mxu0 %v460
        %989 = vmatprep.subr.mxu0 %v465
        %990 = vmatpush1.msra.mxu0 %v464
        %991 = vmatprep.subr.mxu0 %v469
        %992 = vmatpush1.msra.mxu0 %v468
        %993 = vmatprep.subr.mxu0 %v473
        %994 = vmatpush1.msra.mxu0 %v472
        %995 = vmatprep.subr.mxu0 %v477
        %996 = vmatpush1.msra.mxu0 %v476
        %997 = vmatprep.subr.mxu0 %v481
        %998 = vmatpush1.msra.mxu0 %v480
        %999 = vmatprep.subr.mxu0 %v485
        %1000 = vmatpush1.msra.mxu0 %v484
        %1001 = vmatprep.subr.mxu0 %v489
        %1002 = vmatpush1.msra.mxu0 %v488
        %1003 = vmatprep.subr.mxu0 %v493
        %1004 = vmatpush1.msra.mxu0 %v492
        %1005 = vmatprep.subr.mxu0 %v497
        %1006 = vmatpush1.msra.mxu0 %v496
        %1007 = vmatprep.subr.mxu0 0.0
        %1008 = vmatpush1.msra.mxu0 0.0
        %1009 = vmatprep.subr.mxu0 0.0
        %1010 = vmatpush1.msra.mxu0 0.0
        %1011 = vmatprep.subr.mxu0 0.0
        %1012 = vmatpush1.msra.mxu0 0.0
        %1013 = vmatprep.subr.mxu0 0.0
        %1014 = vmatpush1.msra.mxu0 0.0
        %1015 = vmatprep.subr.mxu0 0.0
        %1016 = vmatpush1.msra.mxu0 0.0
        %1017 = vmatprep.subr.mxu0 0.0
        %1018 = vmatpush1.msra.mxu0 0.0
        %1019 = vmatprep.subr.mxu0 0.0
        %1020 = vmatpush1.msra.mxu0 0.0
        %1021 = vmatprep.subr.mxu0 0.0
        %1022 = vmatpush1.msra.mxu0 0.0
        %1023 = vmatprep.subr.mxu0 0.0
        %1024 = vmatpush1.msra.mxu0 0.0
        %1025 = vmatprep.subr.mxu0 0.0
        %1026 = vmatpush1.msra.mxu0 0.0
        %1027 = vmatprep.subr.mxu0 0.0
        %1028 = vmatpush1.msra.mxu0 0.0
        %1029 = vmatprep.subr.mxu0 0.0
        %1030 = vmatpush1.msra.mxu0 0.0
        %1031 = vmatprep.subr.mxu0 0.0
        %1032 = vmatpush1.msra.mxu0 0.0
        %1033 = vmatprep.subr.mxu0 0.0
        %1034 = vmatpush1.msra.mxu0 0.0
        %1035 = vmatprep.subr.mxu0 0.0
        %1036 = vmatpush1.msra.mxu0 0.0
        %1037 = vmatprep.subr.mxu0 0.0
        %1038 = vmatpush1.msra.mxu0 0.0
        %1039 = vmatprep.mubr.f32.mxu0 0.0
        %1040 = vmatmul.mubr.f32.gmra.mrb[0].mxu0 %v964
        %v1041 = vpop.f32.mrb[0].mxu0
        %v1042 = vadd.f32 0.0, %v1041
        %v1043 = vpop.f32.mrb[0].mxu0
        %v1044 = vadd.f32 0.0, %v1043
        %1045 = vdwg.mxu0
        %1046 = vmatprep.subr.mxu0 %v439
        %1047 = vmatpush1.msra.mxu0 %v438
        %1048 = vmatprep.subr.mxu0 %v443
        %1049 = vmatpush1.msra.mxu0 %v442
        %1050 = vmatprep.subr.mxu0 %v447
        %1051 = vmatpush1.msra.mxu0 %v446
        %1052 = vmatprep.subr.mxu0 %v451
        %1053 = vmatpush1.msra.mxu0 %v450
        %1054 = vmatprep.subr.mxu0 %v455
        %1055 = vmatpush1.msra.mxu0 %v454
        %1056 = vmatprep.subr.mxu0 %v459
        %1057 = vmatpush1.msra.mxu0 %v458
        %1058 = vmatprep.subr.mxu0 %v463
        %1059 = vmatpush1.msra.mxu0 %v462
        %1060 = vmatprep.subr.mxu0 %v467
        %1061 = vmatpush1.msra.mxu0 %v466
        %1062 = vmatprep.subr.mxu0 %v471
        %1063 = vmatpush1.msra.mxu0 %v470
        %1064 = vmatprep.subr.mxu0 %v475
        %1065 = vmatpush1.msra.mxu0 %v474
        %1066 = vmatprep.subr.mxu0 %v479
        %1067 = vmatpush1.msra.mxu0 %v478
        %1068 = vmatprep.subr.mxu0 %v483
        %1069 = vmatpush1.msra.mxu0 %v482
        %1070 = vmatprep.subr.mxu0 %v487
        %1071 = vmatpush1.msra.mxu0 %v486
        %1072 = vmatprep.subr.mxu0 %v491
        %1073 = vmatpush1.msra.mxu0 %v490
        %1074 = vmatprep.subr.mxu0 %v495
        %1075 = vmatpush1.msra.mxu0 %v494
        %1076 = vmatprep.subr.mxu0 %v499
        %1077 = vmatpush1.msra.mxu0 %v498
        %1078 = vmatprep.subr.mxu0 0.0
        %1079 = vmatpush1.msra.mxu0 0.0
        %1080 = vmatprep.subr.mxu0 0.0
        %1081 = vmatpush1.msra.mxu0 0.0
        %1082 = vmatprep.subr.mxu0 0.0
        %1083 = vmatpush1.msra.mxu0 0.0
        %1084 = vmatprep.subr.mxu0 0.0
        %1085 = vmatpush1.msra.mxu0 0.0
        %1086 = vmatprep.subr.mxu0 0.0
        %1087 = vmatpush1.msra.mxu0 0.0
        %1088 = vmatprep.subr.mxu0 0.0
        %1089 = vmatpush1.msra.mxu0 0.0
        %1090 = vmatprep.subr.mxu0 0.0
        %1091 = vmatpush1.msra.mxu0 0.0
        %1092 = vmatprep.subr.mxu0 0.0
        %1093 = vmatpush1.msra.mxu0 0.0
        %1094 = vmatprep.subr.mxu0 0.0
        %1095 = vmatpush1.msra.mxu0 0.0
        %1096 = vmatprep.subr.mxu0 0.0
        %1097 = vmatpush1.msra.mxu0 0.0
        %1098 = vmatprep.subr.mxu0 0.0
        %1099 = vmatpush1.msra.mxu0 0.0
        %1100 = vmatprep.subr.mxu0 0.0
        %1101 = vmatpush1.msra.mxu0 0.0
        %1102 = vmatprep.subr.mxu0 0.0
        %1103 = vmatpush1.msra.mxu0 0.0
        %1104 = vmatprep.subr.mxu0 0.0
        %1105 = vmatpush1.msra.mxu0 0.0
        %1106 = vmatprep.subr.mxu0 0.0
        %1107 = vmatpush1.msra.mxu0 0.0
        %1108 = vmatprep.subr.mxu0 0.0
        %1109 = vmatpush1.msra.mxu0 0.0
        %1110 = vmatprep.mubr.f32.mxu0 0.0
        %1111 = vmatmul.mubr.f32.gmra.mrb[0].mxu0 %v964
        %v1112 = vpop.f32.mrb[0].mxu0
        %v1113 = vadd.f32 0.0, %v1112
        %v1114 = vpop.f32.mrb[0].mxu0
        %v1115 = vadd.f32 0.0, %v1114
        %1116 = vdwg.mxu0
        %v1117 = vadd.f32 %v971, %v1042
        %v1118 = vadd.f32 %v972, %v1044
        %v1119 = vadd.f32 %v973, %v1113
        %v1120 = vadd.f32 %v974, %v1115
        %v1121 = vxor.u32 %v1117, 2147483648
        %v1122 = vxor.u32 %v1118, 2147483648
        %v1123 = vxor.u32 %v1119, 2147483648
        %v1124 = vmul.f32 %v1121, 1.442695
        %v1125 = vpow.pop %v1124
        %v1126 = vmul.f32 %v1122, 1.442695
        %v1127 = vpow.pop %v1126
        %v1128 = vmul.f32 %v1123, 1.442695
        %v1129 = vpow.pop %v1128
        %v1130 = vadd.f32 %v1125, 1.0
        %v1131 = vadd.f32 %v1127, 1.0
        %v1132 = vadd.f32 %v1129, 1.0
        %v1133 = vrcp.pop %v1130
        %v1134 = vmul.f32 1.0, %v1133
        %v1135 = vrcp.pop %v1131
        %v1136 = vmul.f32 1.0, %v1135
        %v1137 = vrcp.pop %v1132
        %v1138 = vmul.f32 1.0, %v1137
        %v1139 = vtanh.pop %v1120
        %v1140 = vmul.f32 %v1136, %v962
        %v1141 = vmul.f32 %v1134, %v1139
        %v1142 = vadd.f32 %v1140, %v1141
        %v1143 = vtanh.pop %v1142
        %v1144 = vmul.f32 %v1138, %v1143
        %s1145 = sadd.s32 0, 8
        %s1146 = scalar_lea.vmem [#allocation2], %s1145
        %1147 = vst [vmem:[%s1146] sm:$0xff] %v1144
        %s1148 = smul.u32 2, 4
        %s1149 = smul.addr %s1148, 8
        %s1150 = scalar_lea.vmem [#allocation3], %s1149
        %v1151 = vld [vmem:[%s1150] sm:$0xff]
        %v1152 = vld [vmem:[%s1150 + $0x8] sm:$0xff]
        %v1153 = vld [vmem:[%s1150 + $0x10] sm:$0xff]
        %v1154 = vld [vmem:[%s1150 + $0x18] sm:$0xff]
        %1155 = vmatprep.subr.mxu0 %v437
        %1156 = vmatpush1.msra.mxu0 %v436
        %1157 = vmatprep.subr.mxu0 %v441
        %1158 = vmatpush1.msra.mxu0 %v440
        %1159 = vmatprep.subr.mxu0 %v445
        %1160 = vmatpush1.msra.mxu0 %v444
        %1161 = vmatprep.subr.mxu0 %v449
        %1162 = vmatpush1.msra.mxu0 %v448
        %1163 = vmatprep.subr.mxu0 %v453
        %1164 = vmatpush1.msra.mxu0 %v452
        %1165 = vmatprep.subr.mxu0 %v457
        %1166 = vmatpush1.msra.mxu0 %v456
        %1167 = vmatprep.subr.mxu0 %v461
        %1168 = vmatpush1.msra.mxu0 %v460
        %1169 = vmatprep.subr.mxu0 %v465
        %1170 = vmatpush1.msra.mxu0 %v464
        %1171 = vmatprep.subr.mxu0 %v469
        %1172 = vmatpush1.msra.mxu0 %v468
        %1173 = vmatprep.subr.mxu0 %v473
        %1174 = vmatpush1.msra.mxu0 %v472
        %1175 = vmatprep.subr.mxu0 %v477
        %1176 = vmatpush1.msra.mxu0 %v476
        %1177 = vmatprep.subr.mxu0 %v481
        %1178 = vmatpush1.msra.mxu0 %v480
        %1179 = vmatprep.subr.mxu0 %v485
        %1180 = vmatpush1.msra.mxu0 %v484
        %1181 = vmatprep.subr.mxu0 %v489
        %1182 = vmatpush1.msra.mxu0 %v488
        %1183 = vmatprep.subr.mxu0 %v493
        %1184 = vmatpush1.msra.mxu0 %v492
        %1185 = vmatprep.subr.mxu0 %v497
        %1186 = vmatpush1.msra.mxu0 %v496
        %1187 = vmatprep.subr.mxu0 0.0
        %1188 = vmatpush1.msra.mxu0 0.0
        %1189 = vmatprep.subr.mxu0 0.0
        %1190 = vmatpush1.msra.mxu0 0.0
        %1191 = vmatprep.subr.mxu0 0.0
        %1192 = vmatpush1.msra.mxu0 0.0
        %1193 = vmatprep.subr.mxu0 0.0
        %1194 = vmatpush1.msra.mxu0 0.0
        %1195 = vmatprep.subr.mxu0 0.0
        %1196 = vmatpush1.msra.mxu0 0.0
        %1197 = vmatprep.subr.mxu0 0.0
        %1198 = vmatpush1.msra.mxu0 0.0
        %1199 = vmatprep.subr.mxu0 0.0
        %1200 = vmatpush1.msra.mxu0 0.0
        %1201 = vmatprep.subr.mxu0 0.0
        %1202 = vmatpush1.msra.mxu0 0.0
        %1203 = vmatprep.subr.mxu0 0.0
        %1204 = vmatpush1.msra.mxu0 0.0
        %1205 = vmatprep.subr.mxu0 0.0
        %1206 = vmatpush1.msra.mxu0 0.0
        %1207 = vmatprep.subr.mxu0 0.0
        %1208 = vmatpush1.msra.mxu0 0.0
        %1209 = vmatprep.subr.mxu0 0.0
        %1210 = vmatpush1.msra.mxu0 0.0
        %1211 = vmatprep.subr.mxu0 0.0
        %1212 = vmatpush1.msra.mxu0 0.0
        %1213 = vmatprep.subr.mxu0 0.0
        %1214 = vmatpush1.msra.mxu0 0.0
        %1215 = vmatprep.subr.mxu0 0.0
        %1216 = vmatpush1.msra.mxu0 0.0
        %1217 = vmatprep.subr.mxu0 0.0
        %1218 = vmatpush1.msra.mxu0 0.0
        %1219 = vmatprep.mubr.f32.mxu0 0.0
        %1220 = vmatmul.mubr.f32.gmra.mrb[0].mxu0 %v1144
        %v1221 = vpop.f32.mrb[0].mxu0
        %v1222 = vadd.f32 0.0, %v1221
        %v1223 = vpop.f32.mrb[0].mxu0
        %v1224 = vadd.f32 0.0, %v1223
        %1225 = vdwg.mxu0
        %1226 = vmatprep.subr.mxu0 %v439
        %1227 = vmatpush1.msra.mxu0 %v438
        %1228 = vmatprep.subr.mxu0 %v443
        %1229 = vmatpush1.msra.mxu0 %v442
        %1230 = vmatprep.subr.mxu0 %v447
        %1231 = vmatpush1.msra.mxu0 %v446
        %1232 = vmatprep.subr.mxu0 %v451
        %1233 = vmatpush1.msra.mxu0 %v450
        %1234 = vmatprep.subr.mxu0 %v455
        %1235 = vmatpush1.msra.mxu0 %v454
        %1236 = vmatprep.subr.mxu0 %v459
        %1237 = vmatpush1.msra.mxu0 %v458
        %1238 = vmatprep.subr.mxu0 %v463
        %1239 = vmatpush1.msra.mxu0 %v462
        %1240 = vmatprep.subr.mxu0 %v467
        %1241 = vmatpush1.msra.mxu0 %v466
        %1242 = vmatprep.subr.mxu0 %v471
        %1243 = vmatpush1.msra.mxu0 %v470
        %1244 = vmatprep.subr.mxu0 %v475
        %1245 = vmatpush1.msra.mxu0 %v474
        %1246 = vmatprep.subr.mxu0 %v479
        %1247 = vmatpush1.msra.mxu0 %v478
        %1248 = vmatprep.subr.mxu0 %v483
        %1249 = vmatpush1.msra.mxu0 %v482
        %1250 = vmatprep.subr.mxu0 %v487
        %1251 = vmatpush1.msra.mxu0 %v486
        %1252 = vmatprep.subr.mxu0 %v491
        %1253 = vmatpush1.msra.mxu0 %v490
        %1254 = vmatprep.subr.mxu0 %v495
        %1255 = vmatpush1.msra.mxu0 %v494
        %1256 = vmatprep.subr.mxu0 %v499
        %1257 = vmatpush1.msra.mxu0 %v498
        %1258 = vmatprep.subr.mxu0 0.0
        %1259 = vmatpush1.msra.mxu0 0.0
        %1260 = vmatprep.subr.mxu0 0.0
        %1261 = vmatpush1.msra.mxu0 0.0
        %1262 = vmatprep.subr.mxu0 0.0
        %1263 = vmatpush1.msra.mxu0 0.0
        %1264 = vmatprep.subr.mxu0 0.0
        %1265 = vmatpush1.msra.mxu0 0.0
        %1266 = vmatprep.subr.mxu0 0.0
        %1267 = vmatpush1.msra.mxu0 0.0
        %1268 = vmatprep.subr.mxu0 0.0
        %1269 = vmatpush1.msra.mxu0 0.0
        %1270 = vmatprep.subr.mxu0 0.0
        %1271 = vmatpush1.msra.mxu0 0.0
        %1272 = vmatprep.subr.mxu0 0.0
        %1273 = vmatpush1.msra.mxu0 0.0
        %1274 = vmatprep.subr.mxu0 0.0
        %1275 = vmatpush1.msra.mxu0 0.0
        %1276 = vmatprep.subr.mxu0 0.0
        %1277 = vmatpush1.msra.mxu0 0.0
        %1278 = vmatprep.subr.mxu0 0.0
        %1279 = vmatpush1.msra.mxu0 0.0
        %1280 = vmatprep.subr.mxu0 0.0
        %1281 = vmatpush1.msra.mxu0 0.0
        %1282 = vmatprep.subr.mxu0 0.0
        %1283 = vmatpush1.msra.mxu0 0.0
        %1284 = vmatprep.subr.mxu0 0.0
        %1285 = vmatpush1.msra.mxu0 0.0
        %1286 = vmatprep.subr.mxu0 0.0
        %1287 = vmatpush1.msra.mxu0 0.0
        %1288 = vmatprep.subr.mxu0 0.0
        %1289 = vmatpush1.msra.mxu0 0.0
        %1290 = vmatprep.mubr.f32.mxu0 0.0
        %1291 = vmatmul.mubr.f32.gmra.mrb[0].mxu0 %v1144
        %v1292 = vpop.f32.mrb[0].mxu0
        %v1293 = vadd.f32 0.0, %v1292
        %v1294 = vpop.f32.mrb[0].mxu0
        %v1295 = vadd.f32 0.0, %v1294
        %1296 = vdwg.mxu0
        %v1297 = vadd.f32 %v1151, %v1222
        %v1298 = vadd.f32 %v1152, %v1224
        %v1299 = vadd.f32 %v1153, %v1293
        %v1300 = vadd.f32 %v1154, %v1295
        %v1301 = vxor.u32 %v1297, 2147483648
        %v1302 = vxor.u32 %v1298, 2147483648
        %v1303 = vxor.u32 %v1299, 2147483648
        %v1304 = vmul.f32 %v1301, 1.442695
        %v1305 = vpow.pop %v1304
        %v1306 = vmul.f32 %v1302, 1.442695
        %v1307 = vpow.pop %v1306
        %v1308 = vmul.f32 %v1303, 1.442695
        %v1309 = vpow.pop %v1308
        %v1310 = vadd.f32 %v1305, 1.0
        %v1311 = vadd.f32 %v1307, 1.0
        %v1312 = vadd.f32 %v1309, 1.0
        %v1313 = vrcp.pop %v1310
        %v1314 = vmul.f32 1.0, %v1313
        %v1315 = vrcp.pop %v1311
        %v1316 = vmul.f32 1.0, %v1315
        %v1317 = vrcp.pop %v1312
        %v1318 = vmul.f32 1.0, %v1317
        %v1319 = vtanh.pop %v1300
        %v1320 = vmul.f32 %v1316, %v1142
        %v1321 = vmul.f32 %v1314, %v1319
        %v1322 = vadd.f32 %v1320, %v1321
        %v1323 = vtanh.pop %v1322
        %v1324 = vmul.f32 %v1318, %v1323
        %s1325 = sadd.s32 0, 16
        %s1326 = scalar_lea.vmem [#allocation2], %s1325
        %1327 = vst [vmem:[%s1326] sm:$0xff] %v1324
        %s1328 = smul.u32 3, 4
        %s1329 = smul.addr %s1328, 8
        %s1330 = scalar_lea.vmem [#allocation3], %s1329
        %v1331 = vld [vmem:[%s1330] sm:$0xff]
        %v1332 = vld [vmem:[%s1330 + $0x8] sm:$0xff]
        %v1333 = vld [vmem:[%s1330 + $0x10] sm:$0xff]
        %v1334 = vld [vmem:[%s1330 + $0x18] sm:$0xff]
        %1335 = vmatprep.subr.mxu0 %v437
        %1336 = vmatpush1.msra.mxu0 %v436
        %1337 = vmatprep.subr.mxu0 %v441
        %1338 = vmatpush1.msra.mxu0 %v440
        %1339 = vmatprep.subr.mxu0 %v445
        %1340 = vmatpush1.msra.mxu0 %v444
        %1341 = vmatprep.subr.mxu0 %v449
        %1342 = vmatpush1.msra.mxu0 %v448
        %1343 = vmatprep.subr.mxu0 %v453
        %1344 = vmatpush1.msra.mxu0 %v452
        %1345 = vmatprep.subr.mxu0 %v457
        %1346 = vmatpush1.msra.mxu0 %v456
        %1347 = vmatprep.subr.mxu0 %v461
        %1348 = vmatpush1.msra.mxu0 %v460
        %1349 = vmatprep.subr.mxu0 %v465
        %1350 = vmatpush1.msra.mxu0 %v464
        %1351 = vmatprep.subr.mxu0 %v469
        %1352 = vmatpush1.msra.mxu0 %v468
        %1353 = vmatprep.subr.mxu0 %v473
        %1354 = vmatpush1.msra.mxu0 %v472
        %1355 = vmatprep.subr.mxu0 %v477
        %1356 = vmatpush1.msra.mxu0 %v476
        %1357 = vmatprep.subr.mxu0 %v481
        %1358 = vmatpush1.msra.mxu0 %v480
        %1359 = vmatprep.subr.mxu0 %v485
        %1360 = vmatpush1.msra.mxu0 %v484
        %1361 = vmatprep.subr.mxu0 %v489
        %1362 = vmatpush1.msra.mxu0 %v488
        %1363 = vmatprep.subr.mxu0 %v493
        %1364 = vmatpush1.msra.mxu0 %v492
        %1365 = vmatprep.subr.mxu0 %v497
        %1366 = vmatpush1.msra.mxu0 %v496
        %1367 = vmatprep.subr.mxu0 0.0
        %1368 = vmatpush1.msra.mxu0 0.0
        %1369 = vmatprep.subr.mxu0 0.0
        %1370 = vmatpush1.msra.mxu0 0.0
        %1371 = vmatprep.subr.mxu0 0.0
        %1372 = vmatpush1.msra.mxu0 0.0
        %1373 = vmatprep.subr.mxu0 0.0
        %1374 = vmatpush1.msra.mxu0 0.0
        %1375 = vmatprep.subr.mxu0 0.0
        %1376 = vmatpush1.msra.mxu0 0.0
        %1377 = vmatprep.subr.mxu0 0.0
        %1378 = vmatpush1.msra.mxu0 0.0
        %1379 = vmatprep.subr.mxu0 0.0
        %1380 = vmatpush1.msra.mxu0 0.0
        %1381 = vmatprep.subr.mxu0 0.0
        %1382 = vmatpush1.msra.mxu0 0.0
        %1383 = vmatprep.subr.mxu0 0.0
        %1384 = vmatpush1.msra.mxu0 0.0
        %1385 = vmatprep.subr.mxu0 0.0
        %1386 = vmatpush1.msra.mxu0 0.0
        %1387 = vmatprep.subr.mxu0 0.0
        %1388 = vmatpush1.msra.mxu0 0.0
        %1389 = vmatprep.subr.mxu0 0.0
        %1390 = vmatpush1.msra.mxu0 0.0
        %1391 = vmatprep.subr.mxu0 0.0
        %1392 = vmatpush1.msra.mxu0 0.0
        %1393 = vmatprep.subr.mxu0 0.0
        %1394 = vmatpush1.msra.mxu0 0.0
        %1395 = vmatprep.subr.mxu0 0.0
        %1396 = vmatpush1.msra.mxu0 0.0
        %1397 = vmatprep.subr.mxu0 0.0
        %1398 = vmatpush1.msra.mxu0 0.0
        %1399 = vmatprep.mubr.f32.mxu0 0.0
        %1400 = vmatmul.mubr.f32.gmra.mrb[0].mxu0 %v1324
        %v1401 = vpop.f32.mrb[0].mxu0
        %v1402 = vadd.f32 0.0, %v1401
        %v1403 = vpop.f32.mrb[0].mxu0
        %v1404 = vadd.f32 0.0, %v1403
        %1405 = vdwg.mxu0
        %1406 = vmatprep.subr.mxu0 %v439
        %1407 = vmatpush1.msra.mxu0 %v438
        %1408 = vmatprep.subr.mxu0 %v443
        %1409 = vmatpush1.msra.mxu0 %v442
        %1410 = vmatprep.subr.mxu0 %v447
        %1411 = vmatpush1.msra.mxu0 %v446
        %1412 = vmatprep.subr.mxu0 %v451
        %1413 = vmatpush1.msra.mxu0 %v450
        %1414 = vmatprep.subr.mxu0 %v455
        %1415 = vmatpush1.msra.mxu0 %v454
        %1416 = vmatprep.subr.mxu0 %v459
        %1417 = vmatpush1.msra.mxu0 %v458
        %1418 = vmatprep.subr.mxu0 %v463
        %1419 = vmatpush1.msra.mxu0 %v462
        %1420 = vmatprep.subr.mxu0 %v467
        %1421 = vmatpush1.msra.mxu0 %v466
        %1422 = vmatprep.subr.mxu0 %v471
        %1423 = vmatpush1.msra.mxu0 %v470
        %1424 = vmatprep.subr.mxu0 %v475
        %1425 = vmatpush1.msra.mxu0 %v474
        %1426 = vmatprep.subr.mxu0 %v479
        %1427 = vmatpush1.msra.mxu0 %v478
        %1428 = vmatprep.subr.mxu0 %v483
        %1429 = vmatpush1.msra.mxu0 %v482
        %1430 = vmatprep.subr.mxu0 %v487
        %1431 = vmatpush1.msra.mxu0 %v486
        %1432 = vmatprep.subr.mxu0 %v491
        %1433 = vmatpush1.msra.mxu0 %v490
        %1434 = vmatprep.subr.mxu0 %v495
        %1435 = vmatpush1.msra.mxu0 %v494
        %1436 = vmatprep.subr.mxu0 %v499
        %1437 = vmatpush1.msra.mxu0 %v498
        %1438 = vmatprep.subr.mxu0 0.0
        %1439 = vmatpush1.msra.mxu0 0.0
        %1440 = vmatprep.subr.mxu0 0.0
        %1441 = vmatpush1.msra.mxu0 0.0
        %1442 = vmatprep.subr.mxu0 0.0
        %1443 = vmatpush1.msra.mxu0 0.0
        %1444 = vmatprep.subr.mxu0 0.0
        %1445 = vmatpush1.msra.mxu0 0.0
        %1446 = vmatprep.subr.mxu0 0.0
        %1447 = vmatpush1.msra.mxu0 0.0
        %1448 = vmatprep.subr.mxu0 0.0
        %1449 = vmatpush1.msra.mxu0 0.0
        %1450 = vmatprep.subr.mxu0 0.0
        %1451 = vmatpush1.msra.mxu0 0.0
        %1452 = vmatprep.subr.mxu0 0.0
        %1453 = vmatpush1.msra.mxu0 0.0
        %1454 = vmatprep.subr.mxu0 0.0
        %1455 = vmatpush1.msra.mxu0 0.0
        %1456 = vmatprep.subr.mxu0 0.0
        %1457 = vmatpush1.msra.mxu0 0.0
        %1458 = vmatprep.subr.mxu0 0.0
        %1459 = vmatpush1.msra.mxu0 0.0
        %1460 = vmatprep.subr.mxu0 0.0
        %1461 = vmatpush1.msra.mxu0 0.0
        %1462 = vmatprep.subr.mxu0 0.0
        %1463 = vmatpush1.msra.mxu0 0.0
        %1464 = vmatprep.subr.mxu0 0.0
        %1465 = vmatpush1.msra.mxu0 0.0
        %1466 = vmatprep.subr.mxu0 0.0
        %1467 = vmatpush1.msra.mxu0 0.0
        %1468 = vmatprep.subr.mxu0 0.0
        %1469 = vmatpush1.msra.mxu0 0.0
        %1470 = vmatprep.mubr.f32.mxu0 0.0
        %1471 = vmatmul.mubr.f32.gmra.mrb[0].mxu0 %v1324
        %v1472 = vpop.f32.mrb[0].mxu0
        %v1473 = vadd.f32 0.0, %v1472
        %v1474 = vpop.f32.mrb[0].mxu0
        %v1475 = vadd.f32 0.0, %v1474
        %1476 = vdwg.mxu0
        %v1477 = vadd.f32 %v1331, %v1402
        %v1478 = vadd.f32 %v1332, %v1404
        %v1479 = vadd.f32 %v1333, %v1473
        %v1480 = vadd.f32 %v1334, %v1475
        %v1481 = vxor.u32 %v1477, 2147483648
        %v1482 = vxor.u32 %v1478, 2147483648
        %v1483 = vxor.u32 %v1479, 2147483648
        %v1484 = vmul.f32 %v1481, 1.442695
        %v1485 = vpow.pop %v1484
        %v1486 = vmul.f32 %v1482, 1.442695
        %v1487 = vpow.pop %v1486
        %v1488 = vmul.f32 %v1483, 1.442695
        %v1489 = vpow.pop %v1488
        %v1490 = vadd.f32 %v1485, 1.0
        %v1491 = vadd.f32 %v1487, 1.0
        %v1492 = vadd.f32 %v1489, 1.0
        %v1493 = vrcp.pop %v1490
        %v1494 = vmul.f32 1.0, %v1493
        %v1495 = vrcp.pop %v1491
        %v1496 = vmul.f32 1.0, %v1495
        %v1497 = vrcp.pop %v1492
        %v1498 = vmul.f32 1.0, %v1497
        %v1499 = vtanh.pop %v1480
        %v1500 = vmul.f32 %v1496, %v1322
        %v1501 = vmul.f32 %v1494, %v1499
        %v1502 = vadd.f32 %v1500, %v1501
        %v1503 = vtanh.pop %v1502
        %v1504 = vmul.f32 %v1498, %v1503
        %s1505 = sadd.s32 0, 24
        %s1506 = scalar_lea.vmem [#allocation2], %s1505
        %1507 = vst [vmem:[%s1506] sm:$0xff] %v1504
        %s1508 = smul.u32 4, 4
        %s1509 = smul.addr %s1508, 8
        %s1510 = scalar_lea.vmem [#allocation3], %s1509
        %v1511 = vld [vmem:[%s1510] sm:$0xff]
        %v1512 = vld [vmem:[%s1510 + $0x8] sm:$0xff]
        %v1513 = vld [vmem:[%s1510 + $0x10] sm:$0xff]
        %v1514 = vld [vmem:[%s1510 + $0x18] sm:$0xff]
        %1515 = vmatprep.subr.mxu0 %v437
        %1516 = vmatpush1.msra.mxu0 %v436
        %1517 = vmatprep.subr.mxu0 %v441
        %1518 = vmatpush1.msra.mxu0 %v440
        %1519 = vmatprep.subr.mxu0 %v445
        %1520 = vmatpush1.msra.mxu0 %v444
        %1521 = vmatprep.subr.mxu0 %v449
        %1522 = vmatpush1.msra.mxu0 %v448
        %1523 = vmatprep.subr.mxu0 %v453
        %1524 = vmatpush1.msra.mxu0 %v452
        %1525 = vmatprep.subr.mxu0 %v457
        %1526 = vmatpush1.msra.mxu0 %v456
        %1527 = vmatprep.subr.mxu0 %v461
        %1528 = vmatpush1.msra.mxu0 %v460
        %1529 = vmatprep.subr.mxu0 %v465
        %1530 = vmatpush1.msra.mxu0 %v464
        %1531 = vmatprep.subr.mxu0 %v469
        %1532 = vmatpush1.msra.mxu0 %v468
        %1533 = vmatprep.subr.mxu0 %v473
        %1534 = vmatpush1.msra.mxu0 %v472
        %1535 = vmatprep.subr.mxu0 %v477
        %1536 = vmatpush1.msra.mxu0 %v476
        %1537 = vmatprep.subr.mxu0 %v481
        %1538 = vmatpush1.msra.mxu0 %v480
        %1539 = vmatprep.subr.mxu0 %v485
        %1540 = vmatpush1.msra.mxu0 %v484
        %1541 = vmatprep.subr.mxu0 %v489
        %1542 = vmatpush1.msra.mxu0 %v488
        %1543 = vmatprep.subr.mxu0 %v493
        %1544 = vmatpush1.msra.mxu0 %v492
        %1545 = vmatprep.subr.mxu0 %v497
        %1546 = vmatpush1.msra.mxu0 %v496
        %1547 = vmatprep.subr.mxu0 0.0
        %1548 = vmatpush1.msra.mxu0 0.0
        %1549 = vmatprep.subr.mxu0 0.0
        %1550 = vmatpush1.msra.mxu0 0.0
        %1551 = vmatprep.subr.mxu0 0.0
        %1552 = vmatpush1.msra.mxu0 0.0
        %1553 = vmatprep.subr.mxu0 0.0
        %1554 = vmatpush1.msra.mxu0 0.0
        %1555 = vmatprep.subr.mxu0 0.0
        %1556 = vmatpush1.msra.mxu0 0.0
        %1557 = vmatprep.subr.mxu0 0.0
        %1558 = vmatpush1.msra.mxu0 0.0
        %1559 = vmatprep.subr.mxu0 0.0
        %1560 = vmatpush1.msra.mxu0 0.0
        %1561 = vmatprep.subr.mxu0 0.0
        %1562 = vmatpush1.msra.mxu0 0.0
        %1563 = vmatprep.subr.mxu0 0.0
        %1564 = vmatpush1.msra.mxu0 0.0
        %1565 = vmatprep.subr.mxu0 0.0
        %1566 = vmatpush1.msra.mxu0 0.0
        %1567 = vmatprep.subr.mxu0 0.0
        %1568 = vmatpush1.msra.mxu0 0.0
        %1569 = vmatprep.subr.mxu0 0.0
        %1570 = vmatpush1.msra.mxu0 0.0
        %1571 = vmatprep.subr.mxu0 0.0
        %1572 = vmatpush1.msra.mxu0 0.0
        %1573 = vmatprep.subr.mxu0 0.0
        %1574 = vmatpush1.msra.mxu0 0.0
        %1575 = vmatprep.subr.mxu0 0.0
        %1576 = vmatpush1.msra.mxu0 0.0
        %1577 = vmatprep.subr.mxu0 0.0
        %1578 = vmatpush1.msra.mxu0 0.0
        %1579 = vmatprep.mubr.f32.mxu0 0.0
        %1580 = vmatmul.mubr.f32.gmra.mrb[0].mxu0 %v1504
        %v1581 = vpop.f32.mrb[0].mxu0
        %v1582 = vadd.f32 0.0, %v1581
        %v1583 = vpop.f32.mrb[0].mxu0
        %v1584 = vadd.f32 0.0, %v1583
        %1585 = vdwg.mxu0
        %1586 = vmatprep.subr.mxu0 %v439
        %1587 = vmatpush1.msra.mxu0 %v438
        %1588 = vmatprep.subr.mxu0 %v443
        %1589 = vmatpush1.msra.mxu0 %v442
        %1590 = vmatprep.subr.mxu0 %v447
        %1591 = vmatpush1.msra.mxu0 %v446
        %1592 = vmatprep.subr.mxu0 %v451
        %1593 = vmatpush1.msra.mxu0 %v450
        %1594 = vmatprep.subr.mxu0 %v455
        %1595 = vmatpush1.msra.mxu0 %v454
        %1596 = vmatprep.subr.mxu0 %v459
        %1597 = vmatpush1.msra.mxu0 %v458
        %1598 = vmatprep.subr.mxu0 %v463
        %1599 = vmatpush1.msra.mxu0 %v462
        %1600 = vmatprep.subr.mxu0 %v467
        %1601 = vmatpush1.msra.mxu0 %v466
        %1602 = vmatprep.subr.mxu0 %v471
        %1603 = vmatpush1.msra.mxu0 %v470
        %1604 = vmatprep.subr.mxu0 %v475
        %1605 = vmatpush1.msra.mxu0 %v474
        %1606 = vmatprep.subr.mxu0 %v479
        %1607 = vmatpush1.msra.mxu0 %v478
        %1608 = vmatprep.subr.mxu0 %v483
        %1609 = vmatpush1.msra.mxu0 %v482
        %1610 = vmatprep.subr.mxu0 %v487
        %1611 = vmatpush1.msra.mxu0 %v486
        %1612 = vmatprep.subr.mxu0 %v491
        %1613 = vmatpush1.msra.mxu0 %v490
        %1614 = vmatprep.subr.mxu0 %v495
        %1615 = vmatpush1.msra.mxu0 %v494
        %1616 = vmatprep.subr.mxu0 %v499
        %1617 = vmatpush1.msra.mxu0 %v498
        %1618 = vmatprep.subr.mxu0 0.0
        %1619 = vmatpush1.msra.mxu0 0.0
        %1620 = vmatprep.subr.mxu0 0.0
        %1621 = vmatpush1.msra.mxu0 0.0
        %1622 = vmatprep.subr.mxu0 0.0
        %1623 = vmatpush1.msra.mxu0 0.0
        %1624 = vmatprep.subr.mxu0 0.0
        %1625 = vmatpush1.msra.mxu0 0.0
        %1626 = vmatprep.subr.mxu0 0.0
        %1627 = vmatpush1.msra.mxu0 0.0
        %1628 = vmatprep.subr.mxu0 0.0
        %1629 = vmatpush1.msra.mxu0 0.0
        %1630 = vmatprep.subr.mxu0 0.0
        %1631 = vmatpush1.msra.mxu0 0.0
        %1632 = vmatprep.subr.mxu0 0.0
        %1633 = vmatpush1.msra.mxu0 0.0
        %1634 = vmatprep.subr.mxu0 0.0
        %1635 = vmatpush1.msra.mxu0 0.0
        %1636 = vmatprep.subr.mxu0 0.0
        %1637 = vmatpush1.msra.mxu0 0.0
        %1638 = vmatprep.subr.mxu0 0.0
        %1639 = vmatpush1.msra.mxu0 0.0
        %1640 = vmatprep.subr.mxu0 0.0
        %1641 = vmatpush1.msra.mxu0 0.0
        %1642 = vmatprep.subr.mxu0 0.0
        %1643 = vmatpush1.msra.mxu0 0.0
        %1644 = vmatprep.subr.mxu0 0.0
        %1645 = vmatpush1.msra.mxu0 0.0
        %1646 = vmatprep.subr.mxu0 0.0
        %1647 = vmatpush1.msra.mxu0 0.0
        %1648 = vmatprep.subr.mxu0 0.0
        %1649 = vmatpush1.msra.mxu0 0.0
        %1650 = vmatprep.mubr.f32.mxu0 0.0
        %1651 = vmatmul.mubr.f32.gmra.mrb[0].mxu0 %v1504
        %v1652 = vpop.f32.mrb[0].mxu0
        %v1653 = vadd.f32 0.0, %v1652
        %v1654 = vpop.f32.mrb[0].mxu0
        %v1655 = vadd.f32 0.0, %v1654
        %1656 = vdwg.mxu0
        %v1657 = vadd.f32 %v1511, %v1582
        %v1658 = vadd.f32 %v1512, %v1584
        %v1659 = vadd.f32 %v1513, %v1653
        %v1660 = vadd.f32 %v1514, %v1655
        %v1661 = vxor.u32 %v1657, 2147483648
        %v1662 = vxor.u32 %v1658, 2147483648
        %v1663 = vxor.u32 %v1659, 2147483648
        %v1664 = vmul.f32 %v1661, 1.442695
        %v1665 = vpow.pop %v1664
        %v1666 = vmul.f32 %v1662, 1.442695
        %v1667 = vpow.pop %v1666
        %v1668 = vmul.f32 %v1663, 1.442695
        %v1669 = vpow.pop %v1668
        %v1670 = vadd.f32 %v1665, 1.0
        %v1671 = vadd.f32 %v1667, 1.0
        %v1672 = vadd.f32 %v1669, 1.0
        %v1673 = vrcp.pop %v1670
        %v1674 = vmul.f32 1.0, %v1673
        %v1675 = vrcp.pop %v1671
        %v1676 = vmul.f32 1.0, %v1675
        %v1677 = vrcp.pop %v1672
        %v1678 = vmul.f32 1.0, %v1677
        %v1679 = vtanh.pop %v1660
        %v1680 = vmul.f32 %v1676, %v1502
        %v1681 = vmul.f32 %v1674, %v1679
        %v1682 = vadd.f32 %v1680, %v1681
        %v1683 = vtanh.pop %v1682
        %v1684 = vmul.f32 %v1678, %v1683
        %s1685 = sadd.s32 0, 32
        %s1686 = scalar_lea.vmem [#allocation2], %s1685
        %1687 = vst [vmem:[%s1686] sm:$0xff] %v1684
        %s1688 = smul.u32 5, 4
        %s1689 = smul.addr %s1688, 8
        %s1690 = scalar_lea.vmem [#allocation3], %s1689
        %v1691 = vld [vmem:[%s1690] sm:$0xff]
        %v1692 = vld [vmem:[%s1690 + $0x8] sm:$0xff]
        %v1693 = vld [vmem:[%s1690 + $0x10] sm:$0xff]
        %v1694 = vld [vmem:[%s1690 + $0x18] sm:$0xff]
        %1695 = vmatprep.subr.mxu0 %v437
        %1696 = vmatpush1.msra.mxu0 %v436
        %1697 = vmatprep.subr.mxu0 %v441
        %1698 = vmatpush1.msra.mxu0 %v440
        %1699 = vmatprep.subr.mxu0 %v445
        %1700 = vmatpush1.msra.mxu0 %v444
        %1701 = vmatprep.subr.mxu0 %v449
        %1702 = vmatpush1.msra.mxu0 %v448
        %1703 = vmatprep.subr.mxu0 %v453
        %1704 = vmatpush1.msra.mxu0 %v452
        %1705 = vmatprep.subr.mxu0 %v457
        %1706 = vmatpush1.msra.mxu0 %v456
        %1707 = vmatprep.subr.mxu0 %v461
        %1708 = vmatpush1.msra.mxu0 %v460
        %1709 = vmatprep.subr.mxu0 %v465
        %1710 = vmatpush1.msra.mxu0 %v464
        %1711 = vmatprep.subr.mxu0 %v469
        %1712 = vmatpush1.msra.mxu0 %v468
        %1713 = vmatprep.subr.mxu0 %v473
        %1714 = vmatpush1.msra.mxu0 %v472
        %1715 = vmatprep.subr.mxu0 %v477
        %1716 = vmatpush1.msra.mxu0 %v476
        %1717 = vmatprep.subr.mxu0 %v481
        %1718 = vmatpush1.msra.mxu0 %v480
        %1719 = vmatprep.subr.mxu0 %v485
        %1720 = vmatpush1.msra.mxu0 %v484
        %1721 = vmatprep.subr.mxu0 %v489
        %1722 = vmatpush1.msra.mxu0 %v488
        %1723 = vmatprep.subr.mxu0 %v493
        %1724 = vmatpush1.msra.mxu0 %v492
        %1725 = vmatprep.subr.mxu0 %v497
        %1726 = vmatpush1.msra.mxu0 %v496
        %1727 = vmatprep.subr.mxu0 0.0
        %1728 = vmatpush1.msra.mxu0 0.0
        %1729 = vmatprep.subr.mxu0 0.0
        %1730 = vmatpush1.msra.mxu0 0.0
        %1731 = vmatprep.subr.mxu0 0.0
        %1732 = vmatpush1.msra.mxu0 0.0
        %1733 = vmatprep.subr.mxu0 0.0
        %1734 = vmatpush1.msra.mxu0 0.0
        %1735 = vmatprep.subr.mxu0 0.0
        %1736 = vmatpush1.msra.mxu0 0.0
        %1737 = vmatprep.subr.mxu0 0.0
        %1738 = vmatpush1.msra.mxu0 0.0
        %1739 = vmatprep.subr.mxu0 0.0
        %1740 = vmatpush1.msra.mxu0 0.0
        %1741 = vmatprep.subr.mxu0 0.0
        %1742 = vmatpush1.msra.mxu0 0.0
        %1743 = vmatprep.subr.mxu0 0.0
        %1744 = vmatpush1.msra.mxu0 0.0
        %1745 = vmatprep.subr.mxu0 0.0
        %1746 = vmatpush1.msra.mxu0 0.0
        %1747 = vmatprep.subr.mxu0 0.0
        %1748 = vmatpush1.msra.mxu0 0.0
        %1749 = vmatprep.subr.mxu0 0.0
        %1750 = vmatpush1.msra.mxu0 0.0
        %1751 = vmatprep.subr.mxu0 0.0
        %1752 = vmatpush1.msra.mxu0 0.0
        %1753 = vmatprep.subr.mxu0 0.0
        %1754 = vmatpush1.msra.mxu0 0.0
        %1755 = vmatprep.subr.mxu0 0.0
        %1756 = vmatpush1.msra.mxu0 0.0
        %1757 = vmatprep.subr.mxu0 0.0
        %1758 = vmatpush1.msra.mxu0 0.0
        %1759 = vmatprep.mubr.f32.mxu0 0.0
        %1760 = vmatmul.mubr.f32.gmra.mrb[0].mxu0 %v1684
        %v1761 = vpop.f32.mrb[0].mxu0
        %v1762 = vadd.f32 0.0, %v1761
        %v1763 = vpop.f32.mrb[0].mxu0
        %v1764 = vadd.f32 0.0, %v1763
        %1765 = vdwg.mxu0
        %1766 = vmatprep.subr.mxu0 %v439
        %1767 = vmatpush1.msra.mxu0 %v438
        %1768 = vmatprep.subr.mxu0 %v443
        %1769 = vmatpush1.msra.mxu0 %v442
        %1770 = vmatprep.subr.mxu0 %v447
        %1771 = vmatpush1.msra.mxu0 %v446
        %1772 = vmatprep.subr.mxu0 %v451
        %1773 = vmatpush1.msra.mxu0 %v450
        %1774 = vmatprep.subr.mxu0 %v455
        %1775 = vmatpush1.msra.mxu0 %v454
        %1776 = vmatprep.subr.mxu0 %v459
        %1777 = vmatpush1.msra.mxu0 %v458
        %1778 = vmatprep.subr.mxu0 %v463
        %1779 = vmatpush1.msra.mxu0 %v462
        %1780 = vmatprep.subr.mxu0 %v467
        %1781 = vmatpush1.msra.mxu0 %v466
        %1782 = vmatprep.subr.mxu0 %v471
        %1783 = vmatpush1.msra.mxu0 %v470
        %1784 = vmatprep.subr.mxu0 %v475
        %1785 = vmatpush1.msra.mxu0 %v474
        %1786 = vmatprep.subr.mxu0 %v479
        %1787 = vmatpush1.msra.mxu0 %v478
        %1788 = vmatprep.subr.mxu0 %v483
        %1789 = vmatpush1.msra.mxu0 %v482
        %1790 = vmatprep.subr.mxu0 %v487
        %1791 = vmatpush1.msra.mxu0 %v486
        %1792 = vmatprep.subr.mxu0 %v491
        %1793 = vmatpush1.msra.mxu0 %v490
        %1794 = vmatprep.subr.mxu0 %v495
        %1795 = vmatpush1.msra.mxu0 %v494
        %1796 = vmatprep.subr.mxu0 %v499
        %1797 = vmatpush1.msra.mxu0 %v498
        %1798 = vmatprep.subr.mxu0 0.0
        %1799 = vmatpush1.msra.mxu0 0.0
        %1800 = vmatprep.subr.mxu0 0.0
        %1801 = vmatpush1.msra.mxu0 0.0
        %1802 = vmatprep.subr.mxu0 0.0
        %1803 = vmatpush1.msra.mxu0 0.0
        %1804 = vmatprep.subr.mxu0 0.0
        %1805 = vmatpush1.msra.mxu0 0.0
        %1806 = vmatprep.subr.mxu0 0.0
        %1807 = vmatpush1.msra.mxu0 0.0
        %1808 = vmatprep.subr.mxu0 0.0
        %1809 = vmatpush1.msra.mxu0 0.0
        %1810 = vmatprep.subr.mxu0 0.0
        %1811 = vmatpush1.msra.mxu0 0.0
        %1812 = vmatprep.subr.mxu0 0.0
        %1813 = vmatpush1.msra.mxu0 0.0
        %1814 = vmatprep.subr.mxu0 0.0
        %1815 = vmatpush1.msra.mxu0 0.0
        %1816 = vmatprep.subr.mxu0 0.0
        %1817 = vmatpush1.msra.mxu0 0.0
        %1818 = vmatprep.subr.mxu0 0.0
        %1819 = vmatpush1.msra.mxu0 0.0
        %1820 = vmatprep.subr.mxu0 0.0
        %1821 = vmatpush1.msra.mxu0 0.0
        %1822 = vmatprep.subr.mxu0 0.0
        %1823 = vmatpush1.msra.mxu0 0.0
        %1824 = vmatprep.subr.mxu0 0.0
        %1825 = vmatpush1.msra.mxu0 0.0
        %1826 = vmatprep.subr.mxu0 0.0
        %1827 = vmatpush1.msra.mxu0 0.0
        %1828 = vmatprep.subr.mxu0 0.0
        %1829 = vmatpush1.msra.mxu0 0.0
        %1830 = vmatprep.mubr.f32.mxu0 0.0
        %1831 = vmatmul.mubr.f32.gmra.mrb[0].mxu0 %v1684
        %v1832 = vpop.f32.mrb[0].mxu0
        %v1833 = vadd.f32 0.0, %v1832
        %v1834 = vpop.f32.mrb[0].mxu0
        %v1835 = vadd.f32 0.0, %v1834
        %1836 = vdwg.mxu0
        %v1837 = vadd.f32 %v1691, %v1762
        %v1838 = vadd.f32 %v1692, %v1764
        %v1839 = vadd.f32 %v1693, %v1833
        %v1840 = vadd.f32 %v1694, %v1835
        %v1841 = vxor.u32 %v1837, 2147483648
        %v1842 = vxor.u32 %v1838, 2147483648
        %v1843 = vxor.u32 %v1839, 2147483648
        %v1844 = vmul.f32 %v1841, 1.442695
        %v1845 = vpow.pop %v1844
        %v1846 = vmul.f32 %v1842, 1.442695
        %v1847 = vpow.pop %v1846
        %v1848 = vmul.f32 %v1843, 1.442695
        %v1849 = vpow.pop %v1848
        %v1850 = vadd.f32 %v1845, 1.0
        %v1851 = vadd.f32 %v1847, 1.0
        %v1852 = vadd.f32 %v1849, 1.0
        %v1853 = vrcp.pop %v1850
        %v1854 = vmul.f32 1.0, %v1853
        %v1855 = vrcp.pop %v1851
        %v1856 = vmul.f32 1.0, %v1855
        %v1857 = vrcp.pop %v1852
        %v1858 = vmul.f32 1.0, %v1857
        %v1859 = vtanh.pop %v1840
        %v1860 = vmul.f32 %v1856, %v1682
        %v1861 = vmul.f32 %v1854, %v1859
        %v1862 = vadd.f32 %v1860, %v1861
        %v1863 = vtanh.pop %v1862
        %v1864 = vmul.f32 %v1858, %v1863
        %s1865 = sadd.s32 0, 40
        %s1866 = scalar_lea.vmem [#allocation2], %s1865
        %1867 = vst [vmem:[%s1866] sm:$0xff] %v1864
        %s1868 = smul.u32 6, 4
        %s1869 = smul.addr %s1868, 8
        %s1870 = scalar_lea.vmem [#allocation3], %s1869
        %v1871 = vld [vmem:[%s1870] sm:$0xff]
        %v1872 = vld [vmem:[%s1870 + $0x8] sm:$0xff]
        %v1873 = vld [vmem:[%s1870 + $0x10] sm:$0xff]
        %v1874 = vld [vmem:[%s1870 + $0x18] sm:$0xff]
        %1875 = vmatprep.subr.mxu0 %v437
        %1876 = vmatpush1.msra.mxu0 %v436
        %1877 = vmatprep.subr.mxu0 %v441
        %1878 = vmatpush1.msra.mxu0 %v440
        %1879 = vmatprep.subr.mxu0 %v445
        %1880 = vmatpush1.msra.mxu0 %v444
        %1881 = vmatprep.subr.mxu0 %v449
        %1882 = vmatpush1.msra.mxu0 %v448
        %1883 = vmatprep.subr.mxu0 %v453
        %1884 = vmatpush1.msra.mxu0 %v452
        %1885 = vmatprep.subr.mxu0 %v457
        %1886 = vmatpush1.msra.mxu0 %v456
        %1887 = vmatprep.subr.mxu0 %v461
        %1888 = vmatpush1.msra.mxu0 %v460
        %1889 = vmatprep.subr.mxu0 %v465
        %1890 = vmatpush1.msra.mxu0 %v464
        %1891 = vmatprep.subr.mxu0 %v469
        %1892 = vmatpush1.msra.mxu0 %v468
        %1893 = vmatprep.subr.mxu0 %v473
        %1894 = vmatpush1.msra.mxu0 %v472
        %1895 = vmatprep.subr.mxu0 %v477
        %1896 = vmatpush1.msra.mxu0 %v476
        %1897 = vmatprep.subr.mxu0 %v481
        %1898 = vmatpush1.msra.mxu0 %v480
        %1899 = vmatprep.subr.mxu0 %v485
        %1900 = vmatpush1.msra.mxu0 %v484
        %1901 = vmatprep.subr.mxu0 %v489
        %1902 = vmatpush1.msra.mxu0 %v488
        %1903 = vmatprep.subr.mxu0 %v493
        %1904 = vmatpush1.msra.mxu0 %v492
        %1905 = vmatprep.subr.mxu0 %v497
        %1906 = vmatpush1.msra.mxu0 %v496
        %1907 = vmatprep.subr.mxu0 0.0
        %1908 = vmatpush1.msra.mxu0 0.0
        %1909 = vmatprep.subr.mxu0 0.0
        %1910 = vmatpush1.msra.mxu0 0.0
        %1911 = vmatprep.subr.mxu0 0.0
        %1912 = vmatpush1.msra.mxu0 0.0
        %1913 = vmatprep.subr.mxu0 0.0
        %1914 = vmatpush1.msra.mxu0 0.0
        %1915 = vmatprep.subr.mxu0 0.0
        %1916 = vmatpush1.msra.mxu0 0.0
        %1917 = vmatprep.subr.mxu0 0.0
        %1918 = vmatpush1.msra.mxu0 0.0
        %1919 = vmatprep.subr.mxu0 0.0
        %1920 = vmatpush1.msra.mxu0 0.0
        %1921 = vmatprep.subr.mxu0 0.0
        %1922 = vmatpush1.msra.mxu0 0.0
        %1923 = vmatprep.subr.mxu0 0.0
        %1924 = vmatpush1.msra.mxu0 0.0
        %1925 = vmatprep.subr.mxu0 0.0
        %1926 = vmatpush1.msra.mxu0 0.0
        %1927 = vmatprep.subr.mxu0 0.0
        %1928 = vmatpush1.msra.mxu0 0.0
        %1929 = vmatprep.subr.mxu0 0.0
        %1930 = vmatpush1.msra.mxu0 0.0
        %1931 = vmatprep.subr.mxu0 0.0
        %1932 = vmatpush1.msra.mxu0 0.0
        %1933 = vmatprep.subr.mxu0 0.0
        %1934 = vmatpush1.msra.mxu0 0.0
        %1935 = vmatprep.subr.mxu0 0.0
        %1936 = vmatpush1.msra.mxu0 0.0
        %1937 = vmatprep.subr.mxu0 0.0
        %1938 = vmatpush1.msra.mxu0 0.0
        %1939 = vmatprep.mubr.f32.mxu0 0.0
        %1940 = vmatmul.mubr.f32.gmra.mrb[0].mxu0 %v1864
        %v1941 = vpop.f32.mrb[0].mxu0
        %v1942 = vadd.f32 0.0, %v1941
        %v1943 = vpop.f32.mrb[0].mxu0
        %v1944 = vadd.f32 0.0, %v1943
        %1945 = vdwg.mxu0
        %1946 = vmatprep.subr.mxu0 %v439
        %1947 = vmatpush1.msra.mxu0 %v438
        %1948 = vmatprep.subr.mxu0 %v443
        %1949 = vmatpush1.msra.mxu0 %v442
        %1950 = vmatprep.subr.mxu0 %v447
        %1951 = vmatpush1.msra.mxu0 %v446
        %1952 = vmatprep.subr.mxu0 %v451
        %1953 = vmatpush1.msra.mxu0 %v450
        %1954 = vmatprep.subr.mxu0 %v455
        %1955 = vmatpush1.msra.mxu0 %v454
        %1956 = vmatprep.subr.mxu0 %v459
        %1957 = vmatpush1.msra.mxu0 %v458
        %1958 = vmatprep.subr.mxu0 %v463
        %1959 = vmatpush1.msra.mxu0 %v462
        %1960 = vmatprep.subr.mxu0 %v467
        %1961 = vmatpush1.msra.mxu0 %v466
        %1962 = vmatprep.subr.mxu0 %v471
        %1963 = vmatpush1.msra.mxu0 %v470
        %1964 = vmatprep.subr.mxu0 %v475
        %1965 = vmatpush1.msra.mxu0 %v474
        %1966 = vmatprep.subr.mxu0 %v479
        %1967 = vmatpush1.msra.mxu0 %v478
        %1968 = vmatprep.subr.mxu0 %v483
        %1969 = vmatpush1.msra.mxu0 %v482
        %1970 = vmatprep.subr.mxu0 %v487
        %1971 = vmatpush1.msra.mxu0 %v486
        %1972 = vmatprep.subr.mxu0 %v491
        %1973 = vmatpush1.msra.mxu0 %v490
        %1974 = vmatprep.subr.mxu0 %v495
        %1975 = vmatpush1.msra.mxu0 %v494
        %1976 = vmatprep.subr.mxu0 %v499
        %1977 = vmatpush1.msra.mxu0 %v498
        %1978 = vmatprep.subr.mxu0 0.0
        %1979 = vmatpush1.msra.mxu0 0.0
        %1980 = vmatprep.subr.mxu0 0.0
        %1981 = vmatpush1.msra.mxu0 0.0
        %1982 = vmatprep.subr.mxu0 0.0
        %1983 = vmatpush1.msra.mxu0 0.0
        %1984 = vmatprep.subr.mxu0 0.0
        %1985 = vmatpush1.msra.mxu0 0.0
        %1986 = vmatprep.subr.mxu0 0.0
        %1987 = vmatpush1.msra.mxu0 0.0
        %1988 = vmatprep.subr.mxu0 0.0
        %1989 = vmatpush1.msra.mxu0 0.0
        %1990 = vmatprep.subr.mxu0 0.0
        %1991 = vmatpush1.msra.mxu0 0.0
        %1992 = vmatprep.subr.mxu0 0.0
        %1993 = vmatpush1.msra.mxu0 0.0
        %1994 = vmatprep.subr.mxu0 0.0
        %1995 = vmatpush1.msra.mxu0 0.0
        %1996 = vmatprep.subr.mxu0 0.0
        %1997 = vmatpush1.msra.mxu0 0.0
        %1998 = vmatprep.subr.mxu0 0.0
        %1999 = vmatpush1.msra.mxu0 0.0
        %2000 = vmatprep.subr.mxu0 0.0
        %2001 = vmatpush1.msra.mxu0 0.0
        %2002 = vmatprep.subr.mxu0 0.0
        %2003 = vmatpush1.msra.mxu0 0.0
        %2004 = vmatprep.subr.mxu0 0.0
        %2005 = vmatpush1.msra.mxu0 0.0
        %2006 = vmatprep.subr.mxu0 0.0
        %2007 = vmatpush1.msra.mxu0 0.0
        %2008 = vmatprep.subr.mxu0 0.0
        %2009 = vmatpush1.msra.mxu0 0.0
        %2010 = vmatprep.mubr.f32.mxu0 0.0
        %2011 = vmatmul.mubr.f32.gmra.mrb[0].mxu0 %v1864
        %v2012 = vpop.f32.mrb[0].mxu0
        %v2013 = vadd.f32 0.0, %v2012
        %v2014 = vpop.f32.mrb[0].mxu0
        %v2015 = vadd.f32 0.0, %v2014
        %2016 = vdwg.mxu0
        %v2017 = vadd.f32 %v1871, %v1942
        %v2018 = vadd.f32 %v1872, %v1944
        %v2019 = vadd.f32 %v1873, %v2013
        %v2020 = vadd.f32 %v1874, %v2015
        %v2021 = vxor.u32 %v2017, 2147483648
        %v2022 = vxor.u32 %v2018, 2147483648
        %v2023 = vxor.u32 %v2019, 2147483648
        %v2024 = vmul.f32 %v2021, 1.442695
        %v2025 = vpow.pop %v2024
        %v2026 = vmul.f32 %v2022, 1.442695
        %v2027 = vpow.pop %v2026
        %v2028 = vmul.f32 %v2023, 1.442695
        %v2029 = vpow.pop %v2028
        %v2030 = vadd.f32 %v2025, 1.0
        %v2031 = vadd.f32 %v2027, 1.0
        %v2032 = vadd.f32 %v2029, 1.0
        %v2033 = vrcp.pop %v2030
        %v2034 = vmul.f32 1.0, %v2033
        %v2035 = vrcp.pop %v2031
        %v2036 = vmul.f32 1.0, %v2035
        %v2037 = vrcp.pop %v2032
        %v2038 = vmul.f32 1.0, %v2037
        %v2039 = vtanh.pop %v2020
        %v2040 = vmul.f32 %v2036, %v1862
        %v2041 = vmul.f32 %v2034, %v2039
        %v2042 = vadd.f32 %v2040, %v2041
        %v2043 = vtanh.pop %v2042
        %v2044 = vmul.f32 %v2038, %v2043
        %s2045 = sadd.s32 0, 48
        %s2046 = scalar_lea.vmem [#allocation2], %s2045
        %2047 = vst [vmem:[%s2046] sm:$0xff] %v2044
        %s2048 = smul.u32 7, 4
        %s2049 = smul.addr %s2048, 8
        %s2050 = scalar_lea.vmem [#allocation3], %s2049
        %v2051 = vld [vmem:[%s2050] sm:$0xff]
        %v2052 = vld [vmem:[%s2050 + $0x8] sm:$0xff]
        %v2053 = vld [vmem:[%s2050 + $0x10] sm:$0xff]
        %v2054 = vld [vmem:[%s2050 + $0x18] sm:$0xff]
        %2055 = vmatprep.subr.mxu0 %v437
        %2056 = vmatpush1.msra.mxu0 %v436
        %2057 = vmatprep.subr.mxu0 %v441
        %2058 = vmatpush1.msra.mxu0 %v440
        %2059 = vmatprep.subr.mxu0 %v445
        %2060 = vmatpush1.msra.mxu0 %v444
        %2061 = vmatprep.subr.mxu0 %v449
        %2062 = vmatpush1.msra.mxu0 %v448
        %2063 = vmatprep.subr.mxu0 %v453
        %2064 = vmatpush1.msra.mxu0 %v452
        %2065 = vmatprep.subr.mxu0 %v457
        %2066 = vmatpush1.msra.mxu0 %v456
        %2067 = vmatprep.subr.mxu0 %v461
        %2068 = vmatpush1.msra.mxu0 %v460
        %2069 = vmatprep.subr.mxu0 %v465
        %2070 = vmatpush1.msra.mxu0 %v464
        %2071 = vmatprep.subr.mxu0 %v469
        %2072 = vmatpush1.msra.mxu0 %v468
        %2073 = vmatprep.subr.mxu0 %v473
        %2074 = vmatpush1.msra.mxu0 %v472
        %2075 = vmatprep.subr.mxu0 %v477
        %2076 = vmatpush1.msra.mxu0 %v476
        %2077 = vmatprep.subr.mxu0 %v481
        %2078 = vmatpush1.msra.mxu0 %v480
        %2079 = vmatprep.subr.mxu0 %v485
        %2080 = vmatpush1.msra.mxu0 %v484
        %2081 = vmatprep.subr.mxu0 %v489
        %2082 = vmatpush1.msra.mxu0 %v488
        %2083 = vmatprep.subr.mxu0 %v493
        %2084 = vmatpush1.msra.mxu0 %v492
        %2085 = vmatprep.subr.mxu0 %v497
        %2086 = vmatpush1.msra.mxu0 %v496
        %2087 = vmatprep.subr.mxu0 0.0
        %2088 = vmatpush1.msra.mxu0 0.0
        %2089 = vmatprep.subr.mxu0 0.0
        %2090 = vmatpush1.msra.mxu0 0.0
        %2091 = vmatprep.subr.mxu0 0.0
        %2092 = vmatpush1.msra.mxu0 0.0
        %2093 = vmatprep.subr.mxu0 0.0
        %2094 = vmatpush1.msra.mxu0 0.0
        %2095 = vmatprep.subr.mxu0 0.0
        %2096 = vmatpush1.msra.mxu0 0.0
        %2097 = vmatprep.subr.mxu0 0.0
        %2098 = vmatpush1.msra.mxu0 0.0
        %2099 = vmatprep.subr.mxu0 0.0
        %2100 = vmatpush1.msra.mxu0 0.0
        %2101 = vmatprep.subr.mxu0 0.0
        %2102 = vmatpush1.msra.mxu0 0.0
        %2103 = vmatprep.subr.mxu0 0.0
        %2104 = vmatpush1.msra.mxu0 0.0
        %2105 = vmatprep.subr.mxu0 0.0
        %2106 = vmatpush1.msra.mxu0 0.0
        %2107 = vmatprep.subr.mxu0 0.0
        %2108 = vmatpush1.msra.mxu0 0.0
        %2109 = vmatprep.subr.mxu0 0.0
        %2110 = vmatpush1.msra.mxu0 0.0
        %2111 = vmatprep.subr.mxu0 0.0
        %2112 = vmatpush1.msra.mxu0 0.0
        %2113 = vmatprep.subr.mxu0 0.0
        %2114 = vmatpush1.msra.mxu0 0.0
        %2115 = vmatprep.subr.mxu0 0.0
        %2116 = vmatpush1.msra.mxu0 0.0
        %2117 = vmatprep.subr.mxu0 0.0
        %2118 = vmatpush1.msra.mxu0 0.0
        %2119 = vmatprep.mubr.f32.mxu0 0.0
        %2120 = vmatmul.mubr.f32.gmra.mrb[0].mxu0 %v2044
        %v2121 = vpop.f32.mrb[0].mxu0
        %v2122 = vadd.f32 0.0, %v2121
        %v2123 = vpop.f32.mrb[0].mxu0
        %v2124 = vadd.f32 0.0, %v2123
        %2125 = vdwg.mxu0
        %2126 = vmatprep.subr.mxu0 %v439
        %2127 = vmatpush1.msra.mxu0 %v438
        %2128 = vmatprep.subr.mxu0 %v443
        %2129 = vmatpush1.msra.mxu0 %v442
        %2130 = vmatprep.subr.mxu0 %v447
        %2131 = vmatpush1.msra.mxu0 %v446
        %2132 = vmatprep.subr.mxu0 %v451
        %2133 = vmatpush1.msra.mxu0 %v450
        %2134 = vmatprep.subr.mxu0 %v455
        %2135 = vmatpush1.msra.mxu0 %v454
        %2136 = vmatprep.subr.mxu0 %v459
        %2137 = vmatpush1.msra.mxu0 %v458
        %2138 = vmatprep.subr.mxu0 %v463
        %2139 = vmatpush1.msra.mxu0 %v462
        %2140 = vmatprep.subr.mxu0 %v467
        %2141 = vmatpush1.msra.mxu0 %v466
        %2142 = vmatprep.subr.mxu0 %v471
        %2143 = vmatpush1.msra.mxu0 %v470
        %2144 = vmatprep.subr.mxu0 %v475
        %2145 = vmatpush1.msra.mxu0 %v474
        %2146 = vmatprep.subr.mxu0 %v479
        %2147 = vmatpush1.msra.mxu0 %v478
        %2148 = vmatprep.subr.mxu0 %v483
        %2149 = vmatpush1.msra.mxu0 %v482
        %2150 = vmatprep.subr.mxu0 %v487
        %2151 = vmatpush1.msra.mxu0 %v486
        %2152 = vmatprep.subr.mxu0 %v491
        %2153 = vmatpush1.msra.mxu0 %v490
        %2154 = vmatprep.subr.mxu0 %v495
        %2155 = vmatpush1.msra.mxu0 %v494
        %2156 = vmatprep.subr.mxu0 %v499
        %2157 = vmatpush1.msra.mxu0 %v498
        %2158 = vmatprep.subr.mxu0 0.0
        %2159 = vmatpush1.msra.mxu0 0.0
        %2160 = vmatprep.subr.mxu0 0.0
        %2161 = vmatpush1.msra.mxu0 0.0
        %2162 = vmatprep.subr.mxu0 0.0
        %2163 = vmatpush1.msra.mxu0 0.0
        %2164 = vmatprep.subr.mxu0 0.0
        %2165 = vmatpush1.msra.mxu0 0.0
        %2166 = vmatprep.subr.mxu0 0.0
        %2167 = vmatpush1.msra.mxu0 0.0
        %2168 = vmatprep.subr.mxu0 0.0
        %2169 = vmatpush1.msra.mxu0 0.0
        %2170 = vmatprep.subr.mxu0 0.0
        %2171 = vmatpush1.msra.mxu0 0.0
        %2172 = vmatprep.subr.mxu0 0.0
        %2173 = vmatpush1.msra.mxu0 0.0
        %2174 = vmatprep.subr.mxu0 0.0
        %2175 = vmatpush1.msra.mxu0 0.0
        %2176 = vmatprep.subr.mxu0 0.0
        %2177 = vmatpush1.msra.mxu0 0.0
        %2178 = vmatprep.subr.mxu0 0.0
        %2179 = vmatpush1.msra.mxu0 0.0
        %2180 = vmatprep.subr.mxu0 0.0
        %2181 = vmatpush1.msra.mxu0 0.0
        %2182 = vmatprep.subr.mxu0 0.0
        %2183 = vmatpush1.msra.mxu0 0.0
        %2184 = vmatprep.subr.mxu0 0.0
        %2185 = vmatpush1.msra.mxu0 0.0
        %2186 = vmatprep.subr.mxu0 0.0
        %2187 = vmatpush1.msra.mxu0 0.0
        %2188 = vmatprep.subr.mxu0 0.0
        %2189 = vmatpush1.msra.mxu0 0.0
        %2190 = vmatprep.mubr.f32.mxu0 0.0
        %2191 = vmatmul.mubr.f32.gmra.mrb[0].mxu0 %v2044
        %v2192 = vpop.f32.mrb[0].mxu0
        %v2193 = vadd.f32 0.0, %v2192
        %v2194 = vpop.f32.mrb[0].mxu0
        %v2195 = vadd.f32 0.0, %v2194
        %2196 = vdwg.mxu0
        %v2197 = vadd.f32 %v2051, %v2122
        %v2198 = vadd.f32 %v2052, %v2124
        %v2199 = vadd.f32 %v2053, %v2193
        %v2200 = vadd.f32 %v2054, %v2195
        %v2201 = vxor.u32 %v2197, 2147483648
        %v2202 = vxor.u32 %v2198, 2147483648
        %v2203 = vxor.u32 %v2199, 2147483648
        %v2204 = vmul.f32 %v2201, 1.442695
        %v2205 = vpow.pop %v2204
        %v2206 = vmul.f32 %v2202, 1.442695
        %v2207 = vpow.pop %v2206
        %v2208 = vmul.f32 %v2203, 1.442695
        %v2209 = vpow.pop %v2208
        %v2210 = vadd.f32 %v2205, 1.0
        %v2211 = vadd.f32 %v2207, 1.0
        %v2212 = vadd.f32 %v2209, 1.0
        %v2213 = vrcp.pop %v2210
        %v2214 = vmul.f32 1.0, %v2213
        %v2215 = vrcp.pop %v2211
        %v2216 = vmul.f32 1.0, %v2215
        %v2217 = vrcp.pop %v2212
        %v2218 = vmul.f32 1.0, %v2217
        %v2219 = vtanh.pop %v2200
        %v2220 = vmul.f32 %v2216, %v2042
        %v2221 = vmul.f32 %v2214, %v2219
        %v2222 = vadd.f32 %v2220, %v2221
        %v2223 = vtanh.pop %v2222
        %v2224 = vmul.f32 %v2218, %v2223
        %s2225 = sadd.s32 0, 56
        %s2226 = scalar_lea.vmem [#allocation2], %s2225
        %2227 = vst [vmem:[%s2226] sm:$0xff] %v2224
        %2228 = vst [vmem:[%s304] sm:$0xff] %v2224
        %2229 = vst [vmem:[%s308] sm:$0xff] %v2222
        %p2230 = scmp.eq.s32.totalorder %s24, 1
        // Predicated region
        $region79: #{encoder_forward.1} parent=31 // pred_check
          %p2231 = pneg %p2230
        $region80: #{encoder_forward.1} parent=31 // pred_check_branch
          %2233 = sbr.rel (%p2231) target = $region82
        $region81: #{encoder_forward.1} parent=31 // pred_region
          %v2234 = vld [vmem:[#allocation2] sm:$0xff]
          %v2235 = vld [vmem:[#allocation2 + $0x8] sm:$0xff]
          %v2236 = vld [vmem:[#allocation2 + $0x10] sm:$0xff]
          %v2237 = vld [vmem:[#allocation2 + $0x18] sm:$0xff]
          %v2238 = vld [vmem:[#allocation2 + $0x20] sm:$0xff]
          %v2239 = vld [vmem:[#allocation2 + $0x28] sm:$0xff]
          %v2240 = vld [vmem:[#allocation2 + $0x30] sm:$0xff]
          %v2241 = vld [vmem:[#allocation2 + $0x38] sm:$0xff]
          %2242 = vst [vmem:[%s4] sm:$0xff] %v2234
          %2243 = vst [vmem:[%s4 + $0x8] sm:$0xff] %v2235
          %2244 = vst [vmem:[%s4 + $0x10] sm:$0xff] %v2236
          %2245 = vst [vmem:[%s4 + $0x18] sm:$0xff] %v2237
          %2246 = vst [vmem:[%s4 + $0x20] sm:$0xff] %v2238
          %2247 = vst [vmem:[%s4 + $0x28] sm:$0xff] %v2239
          %2248 = vst [vmem:[%s4 + $0x30] sm:$0xff] %v2240
          %2249 = vst [vmem:[%s4 + $0x38] sm:$0xff] %v2241
        $region82: #{encoder_forward.1} parent=31 // pred_fallthru
          _
        %p2250 = scmp.lt.s32.totalorder %s24, 1
        %s2251 = scalar_select %p2250, %s24, 1
        %s2252 = smul.addr %s2251, 8
        %s2253 = scalar_lea.vmem %s5, %s2252
        %p2254 = scmp.lt.s32.totalorder %s24, 1
        %s2255 = scalar_select %p2254, %s24, 1
        %s2256 = smul.addr %s2255, 8
        %s2257 = scalar_lea.vmem %s6, %s2256
        // Predicated region
        $region83: #{encoder_forward.1} parent=31 // pred_check
          %p2258 = pneg %p115
        $region84: #{encoder_forward.1} parent=31 // pred_check_branch
          %2260 = sbr.rel (%p2258) target = $region86
        $region85: #{encoder_forward.1} parent=31 // pred_region
          _
        $region86: #{encoder_forward.1} parent=31 // pred_fallthru
          _
        // Predicated region
        $region87: #{encoder_forward.1} parent=31 // pred_check
          %p2261 = pneg %p141
        $region88: #{encoder_forward.1} parent=31 // pred_check_branch
          %2263 = sbr.rel (%p2261) target = $region90
        $region89: #{encoder_forward.1} parent=31 // pred_region
          _
        $region90: #{encoder_forward.1} parent=31 // pred_fallthru
          _
        // Predicated region
        $region91: #{encoder_forward.1} parent=31 // pred_check
          %p2264 = pneg %p167
        $region92: #{encoder_forward.1} parent=31 // pred_check_branch
          %2266 = sbr.rel (%p2264) target = $region94
        $region93: #{encoder_forward.1} parent=31 // pred_region
          _
        $region94: #{encoder_forward.1} parent=31 // pred_fallthru
          _
        // Predicated region
        $region95: #{encoder_forward.1} parent=31 // pred_check
          %p2267 = pneg %p115
        $region96: #{encoder_forward.1} parent=31 // pred_check_branch
          %2269 = sbr.rel (%p2267) target = $region98
        $region97: #{encoder_forward.1} parent=31 // pred_region
          _
        $region98: #{encoder_forward.1} parent=31 // pred_fallthru
          _
      $region32: #{encoder_forward.1} parent=5 // pred_fallthru
        _
      %p2270 = scmp.le.s32.totalorder 2, %s19
      // Predicated region
      $region99: #{encoder_forward.1} parent=5 // pred_check
        %p2271 = pneg %p2270
      $region100: #{encoder_forward.1} parent=5 // pred_check_branch
        %2273 = sbr.rel (%p2271) target = $region102
      $region101: #{encoder_forward.1} parent=5 // pred_region
        %s2274 = ssub.s32 %s19, 2
        // Predicated region
        $region103: #{encoder_forward.1} parent=101 // pred_check
          %p2275 = pneg %p147
        $region104: #{encoder_forward.1} parent=101 // pred_check_branch
          %2277 = sbr.rel (%p2275) target = $region106
        $region105: #{encoder_forward.1} parent=101 // pred_region
          %p2278 = scmp.lt.s32.totalorder %s25, 1
          %s2279 = scalar_select %p2278, %s25, 1
          %s2280 = smul.addr %s2279, 8
          %s2281 = scalar_lea.vmem %s5, %s2280
        $region106: #{encoder_forward.1} parent=101 // pred_fallthru
          _
        // Predicated region
        $region107: #{encoder_forward.1} parent=101 // pred_check
          %p2282 = pneg %p173
        $region108: #{encoder_forward.1} parent=101 // pred_check_branch
          %2284 = sbr.rel (%p2282) target = $region110
        $region109: #{encoder_forward.1} parent=101 // pred_region
          %p2285 = scmp.lt.s32.totalorder %s25, 1
          %s2286 = scalar_select %p2285, %s25, 1
          %s2287 = smul.addr %s2286, 8
          %s2288 = scalar_lea.vmem %s6, %s2287
        $region110: #{encoder_forward.1} parent=101 // pred_fallthru
          _
      $region102: #{encoder_forward.1} parent=5 // pred_fallthru
        _
    $region6: #{encoder_forward.1} parent=1 // loop_footer
      %s23 = sadd.s32 1, %s19
    $region7: #{encoder_forward.1} parent=1 // loop_footer_branch
      %18 = sbr.rel target = $region3
    $region8: #{encoder_forward.1} parent=1 // loop_exit
      _
    %2289 = vsyncpa [#allocation6], 1
    %s2290 = scalar_lea.sflag [#allocation6], 1
    %2291 = vsyncpa %s2290, 1
    %2292 = vsyncpa [#allocation8], 1
    %s2293 = scalar_lea.sflag [#allocation8], 1
    %2294 = vsyncpa %s2293, 1
  %2295 = vsyncmov [#allocation4]
  %s2296 = vpop.sfrf %2295
  %p2297 = scmp.eq.s32.totalorder %s2296, 0
  %p2298 = pneg %p2297
  %2300 = shalt.err (%p2298)

</llo_original>
